<compile_context>
chip_gen: v7x
topology: tpu7x:2x2x1
jax: 0.10.0
libtpu: 0.0.40
codegen_flags: <defaults>
</compile_context>

<pallas_src>
import functools

import jax
import jax.numpy as jnp
from jax import lax
from jax.experimental import pallas as pl
from jax.experimental.pallas import tpu as pltpu


def _self_attention_kernel(num_heads, head_dim, compute_dtype, approx_recip,
                           x_ref, wq_ref, bq_ref, wk_ref, bk_ref,
                           wv_ref, bv_ref, wo_ref, bo_ref, o_ref):
    x = x_ref[0]                                            # (S, E), compute dtype

    # Full-width, lane-dense projections: one (S,E)@(E,E) MXU matmul each.
    # Weights are pre-transposed on the host and 1/sqrt(head_dim) is folded
    # into wq/bq, so no in-kernel transpose or scaling is needed.
    q = jnp.dot(x, wq_ref[...], preferred_element_type=jnp.float32) + bq_ref[...]
    k = jnp.dot(x, wk_ref[...], preferred_element_type=jnp.float32) + bk_ref[...]
    v = jnp.dot(x, wv_ref[...], preferred_element_type=jnp.float32) + bv_ref[...]

    qc = q.astype(compute_dtype)
    kc = k.astype(compute_dtype)
    vc = v.astype(compute_dtype)

    # Per-head attention, fully unrolled in-kernel (num_heads is small and
    # static) — no per-head grid steps, no cross-step accumulator traffic.
    # TODO(synk): for very long sequences add a Q-tile grid axis (online
    # softmax) so the (S,S) f32 temporaries stay within v7x's 64 MiB VMEM.
    ctx_parts = []
    for h in range(num_heads):
        lo = h * head_dim
        q_h = qc[:, lo:lo + head_dim]                       # (S, Hd)
        k_h = kc[:, lo:lo + head_dim]
        v_h = vc[:, lo:lo + head_dim]

        # scores = Q_h @ K_h^T without materializing a transposed K
        # (contract d-vs-d).
        scores = lax.dot_general(
            q_h, k_h, dimension_numbers=(((1,), (1,)), ((), ())),
            preferred_element_type=jnp.float32)             # (S, S), f32

        # Numerically-stable softmax statistics in f32.
        m = jnp.max(scores, axis=-1, keepdims=True)
        e = jnp.exp(scores - m)
        l = jnp.sum(e, axis=-1, keepdims=True)              # (S, 1)

        # PV matmul first; normalization applied afterwards on the (S, Hd)
        # context (linear in the normalizer -> identical result, far less
        # VPU work than normalizing the (S, S) weights). Reciprocal on EUP.
        ctx = jnp.dot(e.astype(compute_dtype), v_h,
                      preferred_element_type=jnp.float32)   # (S, Hd)
        ctx = ctx * pl.reciprocal(l, approx=approx_recip)
        ctx_parts.append(ctx.astype(compute_dtype))

    ctx_all = (ctx_parts[0] if num_heads == 1
               else jnp.concatenate(ctx_parts, axis=-1))    # (S, E)

    # Fused output projection: single (S,E)@(E,E) matmul + f32 bias.
    out = jnp.dot(ctx_all, wo_ref[...],
                  preferred_element_type=jnp.float32) + bo_ref[...]
    o_ref[0] = out.astype(o_ref.dtype)


def self_attention(x, params, *, num_heads, compute_dtype=jnp.bfloat16,
                   approx_reciprocal=False):
    """x: (B, S, E).  params: dict of W/b for query/key/value/fc_out in
    PyTorch Linear convention (W: (out, in), b: (out,)).

    compute_dtype controls the MXU-input dtype (bf16 is the fast path on all
    TPU generations); biases, softmax and accumulation are always f32."""
    B, S, E = x.shape
    Hd = E // num_heads
    assert Hd * num_heads == E, "embed_dim must be divisible by num_heads"

    out_dtype = x.dtype
    scale = 1.0 / float(Hd) ** 0.5
    cdt = jnp.dtype(compute_dtype)

    # Host-side prep: pre-transposed (in, out) weights, scale folded into
    # Wq/bq, biases kept in f32.
    wq_t = (params["wq"].T * scale).astype(cdt)
    wk_t = params["wk"].T.astype(cdt)
    wv_t = params["wv"].T.astype(cdt)
    wo_t = params["wo"].T.astype(cdt)
    bq = (params["bq"] * scale).reshape(1, E).astype(jnp.float32)
    bk = params["bk"].reshape(1, E).astype(jnp.float32)
    bv = params["bv"].reshape(1, E).astype(jnp.float32)
    bo = params["bo"].reshape(1, E).astype(jnp.float32)

    # Cast activations once on the host side of the call (halves x DMA bytes
    # on the bf16 path and removes the in-kernel per-step cast).
    x_in = x.astype(cdt)

    kernel = functools.partial(_self_attention_kernel, num_heads, Hd,
                               cdt, bool(approx_reciprocal))

    # Constant block index => Pallas fetches the block once and it stays
    # VMEM-resident across the whole (batch,) grid.
    w_spec = pl.BlockSpec((E, E), lambda b: (0, 0))
    b_spec = pl.BlockSpec((1, E), lambda b: (0, 0))

    # VMEM budget derived from the actual buffers (resident weights +
    # double-buffered x/out blocks + in-kernel temporaries), with headroom,
    # clamped to stay valid on v7x (64 MiB per TensorCore).
    cbytes = cdt.itemsize
    obytes = jnp.dtype(out_dtype).itemsize
    weights_bytes = 4 * E * E * cbytes + 4 * E * 4
    io_bytes = 2 * S * E * (cbytes + obytes)          # double-buffered x / out
    temp_bytes = (3 * S * E * 4                       # q, k, v (f32)
                  + 3 * S * S * 4                     # scores / exp temporaries
                  + 2 * S * E * 4)                    # ctx concat + out (f32)
    vmem_limit = int(min(64 * 1024 * 1024,
                         max(16 * 1024 * 1024,
                             2 * (weights_bytes + io_bytes + temp_bytes))))

    cost = pl.CostEstimate(
        flops=int(B * (8 * S * E * E + 4 * S * S * E)),
        transcendentals=int(B * num_heads * S * S),
        bytes_accessed=int(B * S * E * (cbytes + obytes)
                           + 4 * E * E * cbytes + 4 * E * 4),
    )

    return pl.pallas_call(
        kernel,
        out_shape=jax.ShapeDtypeStruct((B, S, E), out_dtype),
        grid_spec=pltpu.PrefetchScalarGridSpec(
            num_scalar_prefetch=0,
            grid=(B,),
            in_specs=[
                pl.BlockSpec((1, S, E), lambda b: (b, 0, 0)),   # x
                w_spec, b_spec,                                 # query
                w_spec, b_spec,                                 # key
                w_spec, b_spec,                                 # value
                w_spec, b_spec,                                 # fc_out
            ],
            out_specs=pl.BlockSpec((1, S, E), lambda b: (b, 0, 0)),
        ),
        compiler_params=pltpu.CompilerParams(
            dimension_semantics=("parallel",),
            vmem_limit_bytes=vmem_limit),
        cost_estimate=cost,
    )(x_in, wq_t, bq, wk_t, bk, wv_t, bv, wo_t, bo)


def _reference(x, params, *, num_heads):
    """Pure-JAX reference mirroring the PyTorch forward exactly."""
    B, S, E = x.shape
    hd = E // num_heads
    q = x @ params["wq"].T + params["bq"]
    k = x @ params["wk"].T + params["bk"]
    v = x @ params["wv"].T + params["bv"]
    q = q.reshape(B, S, num_heads, hd).transpose(0, 2, 1, 3)
    k = k.reshape(B, S, num_heads, hd).transpose(0, 2, 1, 3)
    v = v.reshape(B, S, num_heads, hd).transpose(0, 2, 1, 3)
    scores = jnp.einsum("bhqd,bhkd->bhqk", q, k) / jnp.sqrt(jnp.float32(hd))
    attn = jax.nn.softmax(scores, axis=-1)
    out = jnp.einsum("bhqk,bhkd->bhqd", attn, v)
    out = out.transpose(0, 2, 1, 3).reshape(B, S, E)
    return out @ params["wo"].T + params["bo"]


if __name__ == "__main__":
    # Small shapes consistent with the module's forward.
    batch, seq_len, embed_dim, num_heads = 2, 8, 32, 4

    key = jax.random.PRNGKey(0)
    keys = jax.random.split(key, 9)

    # Deterministic synthetic parameters (PyTorch Linear shapes: (out, in)).
    def winit(k):
        return jax.random.uniform(k, (embed_dim, embed_dim), jnp.float32,
                                  minval=-0.1, maxval=0.1)

    def binit(k):
        return jax.random.uniform(k, (embed_dim,), jnp.float32,
                                  minval=-0.1, maxval=0.1)

    params = {
        "wq": winit(keys[0]), "bq": binit(keys[1]),
        "wk": winit(keys[2]), "bk": binit(keys[3]),
        "wv": winit(keys[4]), "bv": binit(keys[5]),
        "wo": winit(keys[6]), "bo": binit(keys[7]),
    }

    x = jax.random.normal(keys[8], (batch, seq_len, embed_dim), jnp.float32)

    ref = _reference(x, params, num_heads=num_heads)

    # f32 path: exact semantics of the PyTorch module.
    out = jax.block_until_ready(
        self_attention(x, params, num_heads=num_heads,
                       compute_dtype=jnp.float32))
    assert out.shape == (batch, seq_len, embed_dim)
    assert jnp.allclose(out, ref, atol=1e-4, rtol=1e-4), "f32 mismatch vs reference"

    # bf16 MXU-input fast path (f32 bias/softmax/accumulation), looser tolerance.
    out_bf16 = jax.block_until_ready(
        self_attention(x, params, num_heads=num_heads,
                       compute_dtype=jnp.bfloat16))
    assert jnp.allclose(out_bf16, ref, atol=5e-2, rtol=5e-2), "bf16 mismatch vs reference"

    print("KERNEL_OK")
</pallas_src>

<mosaic_0001>
module attributes {stable_mosaic.version = 11 : i64} {
  func.func @_self_attention_kernel(%arg0: i32, %arg1: memref<1x8x32xf32, #tpu.memory_space<vmem>>, %arg2: memref<32x32xf32, #tpu.memory_space<vmem>>, %arg3: memref<1x32xf32, #tpu.memory_space<vmem>>, %arg4: memref<32x32xf32, #tpu.memory_space<vmem>>, %arg5: memref<1x32xf32, #tpu.memory_space<vmem>>, %arg6: memref<32x32xf32, #tpu.memory_space<vmem>>, %arg7: memref<1x32xf32, #tpu.memory_space<vmem>>, %arg8: memref<32x32xf32, #tpu.memory_space<vmem>>, %arg9: memref<1x32xf32, #tpu.memory_space<vmem>>, %arg10: memref<1x8x32xf32, #tpu.memory_space<vmem>>) attributes {dimension_semantics = [#tpu.dimension_semantics<parallel>], iteration_bounds = array<i64: 2>, scalar_prefetch = 0 : i64, scratch_operands = 0 : i64, tpu.core_type = #tpu.core_type<tc>, window_params = [{transform_indices = @transform_0, window_bounds = array<i64: 1, 8, 32>}, {pipeline_mode = #tpu.pipeline_mode<synchronous>, transform_indices = @transform_1, window_bounds = array<i64: 32, 32>}, {pipeline_mode = #tpu.pipeline_mode<synchronous>, transform_indices = @transform_2, window_bounds = array<i64: 1, 32>}, {pipeline_mode = #tpu.pipeline_mode<synchronous>, transform_indices = @transform_3, window_bounds = array<i64: 32, 32>}, {pipeline_mode = #tpu.pipeline_mode<synchronous>, transform_indices = @transform_4, window_bounds = array<i64: 1, 32>}, {pipeline_mode = #tpu.pipeline_mode<synchronous>, transform_indices = @transform_5, window_bounds = array<i64: 32, 32>}, {pipeline_mode = #tpu.pipeline_mode<synchronous>, transform_indices = @transform_6, window_bounds = array<i64: 1, 32>}, {pipeline_mode = #tpu.pipeline_mode<synchronous>, transform_indices = @transform_7, window_bounds = array<i64: 32, 32>}, {pipeline_mode = #tpu.pipeline_mode<synchronous>, transform_indices = @transform_8, window_bounds = array<i64: 1, 32>}, {transform_indices = @transform_9, window_bounds = array<i64: 1, 8, 32>}]} {
    %c0 = arith.constant 0 : index
    %c0_0 = arith.constant 0 : index
    %c0_1 = arith.constant 0 : index
    %0 = vector.load %arg1[%c0, %c0_0, %c0_1] : memref<1x8x32xf32, #tpu.memory_space<vmem>>, vector<1x8x32xf32>
    %1 = vector.shape_cast %0 : vector<1x8x32xf32> to vector<8x32xf32>
    %c0_2 = arith.constant 0 : index
    %c0_3 = arith.constant 0 : index
    %2 = vector.load %arg2[%c0_2, %c0_3] : memref<32x32xf32, #tpu.memory_space<vmem>>, vector<32x32xf32>
    %cst = arith.constant dense<0.000000e+00> : vector<8x32xf32>
    %3 = tpu.matmul %1, %2, %cst {dimension_numbers = #tpu.dot_dimension_numbers<[1], [0], [0], [1], [0, 0, 1, 1], [], []>} : vector<8x32xf32>, vector<32x32xf32>, vector<8x32xf32> -> vector<8x32xf32>
    %c0_4 = arith.constant 0 : index
    %c0_5 = arith.constant 0 : index
    %4 = vector.load %arg3[%c0_4, %c0_5] : memref<1x32xf32, #tpu.memory_space<vmem>>, vector<1x32xf32>
    %5 = vector.broadcast %4 : vector<1x32xf32> to vector<8x32xf32>
    %6 = arith.addf %3, %5 : vector<8x32xf32>
    %c0_6 = arith.constant 0 : index
    %c0_7 = arith.constant 0 : index
    %7 = vector.load %arg4[%c0_6, %c0_7] : memref<32x32xf32, #tpu.memory_space<vmem>>, vector<32x32xf32>
    %cst_8 = arith.constant dense<0.000000e+00> : vector<8x32xf32>
    %8 = tpu.matmul %1, %7, %cst_8 {dimension_numbers = #tpu.dot_dimension_numbers<[1], [0], [0], [1], [0, 0, 1, 1], [], []>} : vector<8x32xf32>, vector<32x32xf32>, vector<8x32xf32> -> vector<8x32xf32>
    %c0_9 = arith.constant 0 : index
    %c0_10 = arith.constant 0 : index
    %9 = vector.load %arg5[%c0_9, %c0_10] : memref<1x32xf32, #tpu.memory_space<vmem>>, vector<1x32xf32>
    %10 = vector.broadcast %9 : vector<1x32xf32> to vector<8x32xf32>
    %11 = arith.addf %8, %10 : vector<8x32xf32>
    %c0_11 = arith.constant 0 : index
    %c0_12 = arith.constant 0 : index
    %12 = vector.load %arg6[%c0_11, %c0_12] : memref<32x32xf32, #tpu.memory_space<vmem>>, vector<32x32xf32>
    %cst_13 = arith.constant dense<0.000000e+00> : vector<8x32xf32>
    %13 = tpu.matmul %1, %12, %cst_13 {dimension_numbers = #tpu.dot_dimension_numbers<[1], [0], [0], [1], [0, 0, 1, 1], [], []>} : vector<8x32xf32>, vector<32x32xf32>, vector<8x32xf32> -> vector<8x32xf32>
    %c0_14 = arith.constant 0 : index
    %c0_15 = arith.constant 0 : index
    %14 = vector.load %arg7[%c0_14, %c0_15] : memref<1x32xf32, #tpu.memory_space<vmem>>, vector<1x32xf32>
    %15 = vector.broadcast %14 : vector<1x32xf32> to vector<8x32xf32>
    %16 = arith.addf %13, %15 : vector<8x32xf32>
    %17 = vector.extract_strided_slice %6 {offsets = [0, 0], sizes = [8, 8], strides = [1, 1]} : vector<8x32xf32> to vector<8x8xf32>
    %18 = vector.extract_strided_slice %11 {offsets = [0, 0], sizes = [8, 8], strides = [1, 1]} : vector<8x32xf32> to vector<8x8xf32>
    %19 = vector.extract_strided_slice %16 {offsets = [0, 0], sizes = [8, 8], strides = [1, 1]} : vector<8x32xf32> to vector<8x8xf32>
    %cst_16 = arith.constant dense<0.000000e+00> : vector<8x8xf32>
    %20 = tpu.matmul %17, %18, %cst_16 {dimension_numbers = #tpu.dot_dimension_numbers<[1], [1], [0], [0], [0, 0, 1, 0], [], []>} : vector<8x8xf32>, vector<8x8xf32>, vector<8x8xf32> -> vector<8x8xf32>
    %cst_17 = arith.constant dense<0xFF800000> : vector<8xf32>
    %21 = vector.multi_reduction <maximumf>, %20, %cst_17 [1] : vector<8x8xf32> to vector<8xf32>
    %22 = vector.shape_cast %21 : vector<8xf32> to vector<8x1xf32>
    %23 = vector.broadcast %22 : vector<8x1xf32> to vector<8x8xf32>
    %24 = arith.subf %20, %23 : vector<8x8xf32>
    %25 = math.exp %24 : vector<8x8xf32>
    %cst_18 = arith.constant dense<0.000000e+00> : vector<8xf32>
    %26 = vector.multi_reduction <add>, %25, %cst_18 [1] : vector<8x8xf32> to vector<8xf32>
    %27 = vector.shape_cast %26 : vector<8xf32> to vector<8x1xf32>
    %cst_19 = arith.constant dense<0.000000e+00> : vector<8x8xf32>
    %28 = tpu.matmul %25, %19, %cst_19 {dimension_numbers = #tpu.dot_dimension_numbers<[1], [0], [0], [1], [0, 0, 1, 1], [], []>} : vector<8x8xf32>, vector<8x8xf32>, vector<8x8xf32> -> vector<8x8xf32>
    %29 = tpu.reciprocal %27 : vector<8x1xf32> -> vector<8x1xf32>
    %30 = vector.broadcast %29 : vector<8x1xf32> to vector<8x8xf32>
    %31 = arith.mulf %28, %30 : vector<8x8xf32>
    %32 = vector.extract_strided_slice %6 {offsets = [0, 8], sizes = [8, 8], strides = [1, 1]} : vector<8x32xf32> to vector<8x8xf32>
    %33 = vector.extract_strided_slice %11 {offsets = [0, 8], sizes = [8, 8], strides = [1, 1]} : vector<8x32xf32> to vector<8x8xf32>
    %34 = vector.extract_strided_slice %16 {offsets = [0, 8], sizes = [8, 8], strides = [1, 1]} : vector<8x32xf32> to vector<8x8xf32>
    %cst_20 = arith.constant dense<0.000000e+00> : vector<8x8xf32>
    %35 = tpu.matmul %32, %33, %cst_20 {dimension_numbers = #tpu.dot_dimension_numbers<[1], [1], [0], [0], [0, 0, 1, 0], [], []>} : vector<8x8xf32>, vector<8x8xf32>, vector<8x8xf32> -> vector<8x8xf32>
    %cst_21 = arith.constant dense<0xFF800000> : vector<8xf32>
    %36 = vector.multi_reduction <maximumf>, %35, %cst_21 [1] : vector<8x8xf32> to vector<8xf32>
    %37 = vector.shape_cast %36 : vector<8xf32> to vector<8x1xf32>
    %38 = vector.broadcast %37 : vector<8x1xf32> to vector<8x8xf32>
    %39 = arith.subf %35, %38 : vector<8x8xf32>
    %40 = math.exp %39 : vector<8x8xf32>
    %cst_22 = arith.constant dense<0.000000e+00> : vector<8xf32>
    %41 = vector.multi_reduction <add>, %40, %cst_22 [1] : vector<8x8xf32> to vector<8xf32>
    %42 = vector.shape_cast %41 : vector<8xf32> to vector<8x1xf32>
    %cst_23 = arith.constant dense<0.000000e+00> : vector<8x8xf32>
    %43 = tpu.matmul %40, %34, %cst_23 {dimension_numbers = #tpu.dot_dimension_numbers<[1], [0], [0], [1], [0, 0, 1, 1], [], []>} : vector<8x8xf32>, vector<8x8xf32>, vector<8x8xf32> -> vector<8x8xf32>
    %44 = tpu.reciprocal %42 : vector<8x1xf32> -> vector<8x1xf32>
    %45 = vector.broadcast %44 : vector<8x1xf32> to vector<8x8xf32>
    %46 = arith.mulf %43, %45 : vector<8x8xf32>
    %47 = vector.extract_strided_slice %6 {offsets = [0, 16], sizes = [8, 8], strides = [1, 1]} : vector<8x32xf32> to vector<8x8xf32>
    %48 = vector.extract_strided_slice %11 {offsets = [0, 16], sizes = [8, 8], strides = [1, 1]} : vector<8x32xf32> to vector<8x8xf32>
    %49 = vector.extract_strided_slice %16 {offsets = [0, 16], sizes = [8, 8], strides = [1, 1]} : vector<8x32xf32> to vector<8x8xf32>
    %cst_24 = arith.constant dense<0.000000e+00> : vector<8x8xf32>
    %50 = tpu.matmul %47, %48, %cst_24 {dimension_numbers = #tpu.dot_dimension_numbers<[1], [1], [0], [0], [0, 0, 1, 0], [], []>} : vector<8x8xf32>, vector<8x8xf32>, vector<8x8xf32> -> vector<8x8xf32>
    %cst_25 = arith.constant dense<0xFF800000> : vector<8xf32>
    %51 = vector.multi_reduction <maximumf>, %50, %cst_25 [1] : vector<8x8xf32> to vector<8xf32>
    %52 = vector.shape_cast %51 : vector<8xf32> to vector<8x1xf32>
    %53 = vector.broadcast %52 : vector<8x1xf32> to vector<8x8xf32>
    %54 = arith.subf %50, %53 : vector<8x8xf32>
    %55 = math.exp %54 : vector<8x8xf32>
    %cst_26 = arith.constant dense<0.000000e+00> : vector<8xf32>
    %56 = vector.multi_reduction <add>, %55, %cst_26 [1] : vector<8x8xf32> to vector<8xf32>
    %57 = vector.shape_cast %56 : vector<8xf32> to vector<8x1xf32>
    %cst_27 = arith.constant dense<0.000000e+00> : vector<8x8xf32>
    %58 = tpu.matmul %55, %49, %cst_27 {dimension_numbers = #tpu.dot_dimension_numbers<[1], [0], [0], [1], [0, 0, 1, 1], [], []>} : vector<8x8xf32>, vector<8x8xf32>, vector<8x8xf32> -> vector<8x8xf32>
    %59 = tpu.reciprocal %57 : vector<8x1xf32> -> vector<8x1xf32>
    %60 = vector.broadcast %59 : vector<8x1xf32> to vector<8x8xf32>
    %61 = arith.mulf %58, %60 : vector<8x8xf32>
    %62 = vector.extract_strided_slice %6 {offsets = [0, 24], sizes = [8, 8], strides = [1, 1]} : vector<8x32xf32> to vector<8x8xf32>
    %63 = vector.extract_strided_slice %11 {offsets = [0, 24], sizes = [8, 8], strides = [1, 1]} : vector<8x32xf32> to vector<8x8xf32>
    %64 = vector.extract_strided_slice %16 {offsets = [0, 24], sizes = [8, 8], strides = [1, 1]} : vector<8x32xf32> to vector<8x8xf32>
    %cst_28 = arith.constant dense<0.000000e+00> : vector<8x8xf32>
    %65 = tpu.matmul %62, %63, %cst_28 {dimension_numbers = #tpu.dot_dimension_numbers<[1], [1], [0], [0], [0, 0, 1, 0], [], []>} : vector<8x8xf32>, vector<8x8xf32>, vector<8x8xf32> -> vector<8x8xf32>
    %cst_29 = arith.constant dense<0xFF800000> : vector<8xf32>
    %66 = vector.multi_reduction <maximumf>, %65, %cst_29 [1] : vector<8x8xf32> to vector<8xf32>
    %67 = vector.shape_cast %66 : vector<8xf32> to vector<8x1xf32>
    %68 = vector.broadcast %67 : vector<8x1xf32> to vector<8x8xf32>
    %69 = arith.subf %65, %68 : vector<8x8xf32>
    %70 = math.exp %69 : vector<8x8xf32>
    %cst_30 = arith.constant dense<0.000000e+00> : vector<8xf32>
    %71 = vector.multi_reduction <add>, %70, %cst_30 [1] : vector<8x8xf32> to vector<8xf32>
    %72 = vector.shape_cast %71 : vector<8xf32> to vector<8x1xf32>
    %cst_31 = arith.constant dense<0.000000e+00> : vector<8x8xf32>
    %73 = tpu.matmul %70, %64, %cst_31 {dimension_numbers = #tpu.dot_dimension_numbers<[1], [0], [0], [1], [0, 0, 1, 1], [], []>} : vector<8x8xf32>, vector<8x8xf32>, vector<8x8xf32> -> vector<8x8xf32>
    %74 = tpu.reciprocal %72 : vector<8x1xf32> -> vector<8x1xf32>
    %75 = vector.broadcast %74 : vector<8x1xf32> to vector<8x8xf32>
    %76 = arith.mulf %73, %75 : vector<8x8xf32>
    %77 = tpu.concatenate %31, %46, %61, %76 in 1 : vector<8x8xf32>, vector<8x8xf32>, vector<8x8xf32>, vector<8x8xf32> -> vector<8x32xf32>
    %c0_32 = arith.constant 0 : index
    %c0_33 = arith.constant 0 : index
    %78 = vector.load %arg8[%c0_32, %c0_33] : memref<32x32xf32, #tpu.memory_space<vmem>>, vector<32x32xf32>
    %cst_34 = arith.constant dense<0.000000e+00> : vector<8x32xf32>
    %79 = tpu.matmul %77, %78, %cst_34 {dimension_numbers = #tpu.dot_dimension_numbers<[1], [0], [0], [1], [0, 0, 1, 1], [], []>} : vector<8x32xf32>, vector<32x32xf32>, vector<8x32xf32> -> vector<8x32xf32>
    %c0_35 = arith.constant 0 : index
    %c0_36 = arith.constant 0 : index
    %80 = vector.load %arg9[%c0_35, %c0_36] : memref<1x32xf32, #tpu.memory_space<vmem>>, vector<1x32xf32>
    %81 = vector.broadcast %80 : vector<1x32xf32> to vector<8x32xf32>
    %82 = arith.addf %79, %81 : vector<8x32xf32>
    %c0_37 = arith.constant 0 : index
    %c0_38 = arith.constant 0 : index
    %c0_39 = arith.constant 0 : index
    %83 = vector.load %arg10[%c0_37, %c0_38, %c0_39] : memref<1x8x32xf32, #tpu.memory_space<vmem>>, vector<1x8x32xf32>
    %84 = vector.shape_cast %83 : vector<1x8x32xf32> to vector<8x32xf32>
    %85 = vector.shape_cast %82 : vector<8x32xf32> to vector<1x8x32xf32>
    tpu.vector_store %arg10[%c0_37, %c0_38, %c0_39], %85 {strides = array<i32>} : memref<1x8x32xf32, #tpu.memory_space<vmem>>, vector<1x8x32xf32>,
    return
  }
  func.func @transform_0(%arg0: i32) -> (i32, i32, i32) {
    %c0_i32 = arith.constant 0 : i32
    %c0_i32_0 = arith.constant 0 : i32
    %c0_i32_1 = arith.constant 0 : i32
    return %arg0, %c0_i32, %c0_i32_0 : i32, i32, i32
  }
  func.func @transform_1(%arg0: i32) -> (i32, i32) {
    %c0_i32 = arith.constant 0 : i32
    %c0_i32_0 = arith.constant 0 : i32
    %c0_i32_1 = arith.constant 0 : i32
    return %c0_i32, %c0_i32_0 : i32, i32
  }
  func.func @transform_2(%arg0: i32) -> (i32, i32) {
    %c0_i32 = arith.constant 0 : i32
    %c0_i32_0 = arith.constant 0 : i32
    %c0_i32_1 = arith.constant 0 : i32
    return %c0_i32, %c0_i32_0 : i32, i32
  }
  func.func @transform_3(%arg0: i32) -> (i32, i32) {
    %c0_i32 = arith.constant 0 : i32
    %c0_i32_0 = arith.constant 0 : i32
    %c0_i32_1 = arith.constant 0 : i32
    return %c0_i32, %c0_i32_0 : i32, i32
  }
  func.func @transform_4(%arg0: i32) -> (i32, i32) {
    %c0_i32 = arith.constant 0 : i32
    %c0_i32_0 = arith.constant 0 : i32
    %c0_i32_1 = arith.constant 0 : i32
    return %c0_i32, %c0_i32_0 : i32, i32
  }
  func.func @transform_5(%arg0: i32) -> (i32, i32) {
    %c0_i32 = arith.constant 0 : i32
    %c0_i32_0 = arith.constant 0 : i32
    %c0_i32_1 = arith.constant 0 : i32
    return %c0_i32, %c0_i32_0 : i32, i32
  }
  func.func @transform_6(%arg0: i32) -> (i32, i32) {
    %c0_i32 = arith.constant 0 : i32
    %c0_i32_0 = arith.constant 0 : i32
    %c0_i32_1 = arith.constant 0 : i32
    return %c0_i32, %c0_i32_0 : i32, i32
  }
  func.func @transform_7(%arg0: i32) -> (i32, i32) {
    %c0_i32 = arith.constant 0 : i32
    %c0_i32_0 = arith.constant 0 : i32
    %c0_i32_1 = arith.constant 0 : i32
    return %c0_i32, %c0_i32_0 : i32, i32
  }
  func.func @transform_8(%arg0: i32) -> (i32, i32) {
    %c0_i32 = arith.constant 0 : i32
    %c0_i32_0 = arith.constant 0 : i32
    %c0_i32_1 = arith.constant 0 : i32
    return %c0_i32, %c0_i32_0 : i32, i32
  }
  func.func @transform_9(%arg0: i32) -> (i32, i32, i32) {
    %c0_i32 = arith.constant 0 : i32
    %c0_i32_0 = arith.constant 0 : i32
    %c0_i32_1 = arith.constant 0 : i32
    return %arg0, %c0_i32, %c0_i32_0 : i32, i32, i32
  }
}

</mosaic_0001>

<llo_original>
// kernel: tpu_custom_call.1
$region0: #{tpu_custom_call.1}
  #allocation0 [shape = 'u32[]', space=smem, size = 0x4, offset = 0x4, fixed_abs, tag = 'smem constant byte address 0x4 - core index']
  #allocation1 [shape = 'u32[144,128]{1,0:T(1,128)}', space=vmem, size = 0x12000, scoped, tag = 'internal scratch']
  %s0 = inlined_call_operand.hbm [shape: f32[2,8,32], index: 0, kind: input, shape index: {}]
  %s1 = inlined_call_operand.hbm [shape: f32[32,32], index: 1, kind: input, shape index: {}]
  %s2 = inlined_call_operand.vmem [shape: f32[1,32], index: 2, kind: input, shape index: {}]
  %s3 = inlined_call_operand.hbm [shape: f32[32,32], index: 3, kind: input, shape index: {}]
  %s4 = inlined_call_operand.vmem [shape: f32[1,32], index: 4, kind: input, shape index: {}]
  %s5 = inlined_call_operand.hbm [shape: f32[32,32], index: 5, kind: input, shape index: {}]
  %s6 = inlined_call_operand.vmem [shape: f32[1,32], index: 6, kind: input, shape index: {}]
  %s7 = inlined_call_operand.hbm [shape: f32[32,32], index: 7, kind: input, shape index: {}]
  %s8 = inlined_call_operand.vmem [shape: f32[1,32], index: 8, kind: input, shape index: {}]
  %s9 = inlined_call_operand.hbm [shape: f32[2,8,32], index: 9, kind: output, shape index: {}]
  %s10 = sld [smem:[#allocation0]]
  $region89: #{tpu_custom_call.1} parent=0
    _
  %s12 = ssub.s32 1, %s10
  %s13 = scalar_select 0, %s12, %s10
  $region1: #{tpu_custom_call.1} parent=0
    #allocation2 [shape = 'u8[8192]{0}', space=vmem, size = 0x2000, scoped, tag = 'input window, operand 0']
    #allocation3 [shape = 's32[2]{0}', space=sflag, size = 0x8, scoped, tag = 'scoped memory for tpu_custom_call.1']
    #allocation4 [shape = 's32[2]{0}', space=sflag, size = 0x8, scoped, tag = 'scoped memory for tpu_custom_call.1']
    #allocation5 [shape = 'u8[16384]{0}', space=vmem, size = 0x4000, scoped, tag = 'input window, operand 1, single buffered']
    #allocation6 [shape = 's32[1]{0}', space=sflag, size = 0x4, scoped, tag = 'scoped memory for tpu_custom_call.1']
    #allocation7 [shape = 'u8[16384]{0}', space=vmem, size = 0x4000, scoped, tag = 'input window, operand 3, single buffered']
    #allocation8 [shape = 'u8[16384]{0}', space=vmem, size = 0x4000, scoped, tag = 'input window, operand 5, single buffered']
    #allocation9 [shape = 's32[1]{0}', space=sflag, size = 0x4, scoped, tag = 'scoped memory for tpu_custom_call.1']
    #allocation10 [shape = 'u8[16384]{0}', space=vmem, size = 0x4000, scoped, tag = 'input window, operand 7, single buffered']
    #allocation11 [shape = 'u8[8192]{0}', space=vmem, size = 0x2000, scoped, tag = 'output window, operand 0']
    %14 = vsyncpa [#allocation3], 0
    %s15 = scalar_lea.sflag [#allocation3], 1
    %16 = vsyncpa %s15, 0
    %17 = vsyncpa [#allocation6], 0
    %18 = vsyncpa [#allocation9], 0
    %19 = vsyncpa [#allocation4], 0
    %s20 = scalar_lea.sflag [#allocation4], 1
    %21 = vsyncpa %s20, 0
    loop: start=0, step=1, limit=4
    $region2: #{tpu_custom_call.1} parent=1 // loop_pre_header
      _
    $region3: #{tpu_custom_call.1} parent=1 // loop_header
      %s23 = sphi 0, %s27
      %p24 = scmp.ge.s32.totalorder %s23, 4
      %s33 = sphi 0, %s35
      %s36 = sphi 0, %s33
      %s37 = sphi 0, %s36
      %s53 = sphi 0, %s37
      %s57 = sphi 0, %s57
      %s59 = sphi 0, %s57
      %s60 = sphi 0, %s59
      %s74 = sphi 0, %s60
      %s78 = sphi 0, %s78
      %s80 = sphi 0, %s78
      %s81 = sphi 0, %s80
      %s95 = sphi 0, %s81
      %s99 = sphi 0, %s99
      %s101 = sphi 0, %s99
      %s102 = sphi 0, %s101
      %s116 = sphi 0, %s102
      %s120 = sphi 0, %s120
      %s122 = sphi 0, %s120
      %s123 = sphi 0, %s122
      %s137 = sphi 0, %s123
      %s141 = sphi 0, %s141
      %s143 = sphi 0, %s141
      %s144 = sphi 0, %s143
      %s158 = sphi 0, %s144
      %s162 = sphi 0, %s162
      %s164 = sphi 0, %s162
      %s165 = sphi 0, %s164
      %s179 = sphi 0, %s165
      %s183 = sphi 0, %s183
      %s185 = sphi 0, %s183
      %s186 = sphi 0, %s185
      %s200 = sphi 0, %s186
      %s204 = sphi 0, %s204
      %s206 = sphi 0, %s204
      %s207 = sphi 0, %s206
      %s221 = sphi 0, %s207
      %s227 = sphi 0, %s229
      %s230 = sphi 0, %s227
      %s231 = sphi 0, %s230
      %s247 = sphi 0, %s231
    $region4: #{tpu_custom_call.1} parent=1 // loop_header_branch
      %26 = sbr.rel (%p24) target = $region8
    $region5: #{tpu_custom_call.1} parent=1 // loop_body
      %s28 = ssub.s32 %s23, 1
      %s29 = ssub.s32 %s23, 2
      %s30 = sadd.s32 %s23, 1
      %s31 = ssub.s32 %s23, %s30
      %p32 = scmp.eq.s32.totalorder %s31, 0
      %s34 = sadd.s32 %s33, 1
      %s35 = scalar_select %p32, %s33, %s34
      %p38 = pneg %p32
      %p39 = scmp.eq.s32.totalorder %s23, 1
      %p40 = por %p38, %p39
      %p41 = scmp.ne.s32.totalorder %s33, %s36
      %p42 = scmp.eq.s32.totalorder %s23, 0
      %p43 = por %p41, %p42
      %p44 = scmp.ne.s32.totalorder %s33, %s36
      %p45 = scmp.eq.s32.totalorder %s28, 1
      %p46 = por %p44, %p45
      %p47 = scmp.ne.s32.totalorder %s36, %s37
      %p48 = scmp.eq.s32.totalorder %s28, 0
      %p49 = por %p47, %p48
      %p50 = scmp.ne.s32.totalorder %s36, %s37
      %p51 = scmp.eq.s32.totalorder %s29, 1
      %p52 = por %p50, %p51
      %p54 = scmp.ne.s32.totalorder %s37, %s53
      %p55 = scmp.eq.s32.totalorder %s29, 0
      %p56 = por %p54, %p55
      %s58 = sadd.s32 %s57, 1
      %p61 = scmp.eq.s32.totalorder %s23, 1
      %p62 = scmp.ne.s32.totalorder %s57, %s59
      %p63 = scmp.eq.s32.totalorder %s23, 0
      %p64 = por %p62, %p63
      %p65 = scmp.ne.s32.totalorder %s57, %s59
      %p66 = scmp.eq.s32.totalorder %s28, 1
      %p67 = por %p65, %p66
      %p68 = scmp.ne.s32.totalorder %s59, %s60
      %p69 = scmp.eq.s32.totalorder %s28, 0
      %p70 = por %p68, %p69
      %p71 = scmp.ne.s32.totalorder %s59, %s60
      %p72 = scmp.eq.s32.totalorder %s29, 1
      %p73 = por %p71, %p72
      %p75 = scmp.ne.s32.totalorder %s60, %s74
      %p76 = scmp.eq.s32.totalorder %s29, 0
      %p77 = por %p75, %p76
      %s79 = sadd.s32 %s78, 1
      %p82 = scmp.eq.s32.totalorder %s23, 1
      %p83 = scmp.ne.s32.totalorder %s78, %s80
      %p84 = scmp.eq.s32.totalorder %s23, 0
      %p85 = por %p83, %p84
      %p86 = scmp.ne.s32.totalorder %s78, %s80
      %p87 = scmp.eq.s32.totalorder %s28, 1
      %p88 = por %p86, %p87
      %p89 = scmp.ne.s32.totalorder %s80, %s81
      %p90 = scmp.eq.s32.totalorder %s28, 0
      %p91 = por %p89, %p90
      %p92 = scmp.ne.s32.totalorder %s80, %s81
      %p93 = scmp.eq.s32.totalorder %s29, 1
      %p94 = por %p92, %p93
      %p96 = scmp.ne.s32.totalorder %s81, %s95
      %p97 = scmp.eq.s32.totalorder %s29, 0
      %p98 = por %p96, %p97
      %s100 = sadd.s32 %s99, 1
      %p103 = scmp.eq.s32.totalorder %s23, 1
      %p104 = scmp.ne.s32.totalorder %s99, %s101
      %p105 = scmp.eq.s32.totalorder %s23, 0
      %p106 = por %p104, %p105
      %p107 = scmp.ne.s32.totalorder %s99, %s101
      %p108 = scmp.eq.s32.totalorder %s28, 1
      %p109 = por %p107, %p108
      %p110 = scmp.ne.s32.totalorder %s101, %s102
      %p111 = scmp.eq.s32.totalorder %s28, 0
      %p112 = por %p110, %p111
      %p113 = scmp.ne.s32.totalorder %s101, %s102
      %p114 = scmp.eq.s32.totalorder %s29, 1
      %p115 = por %p113, %p114
      %p117 = scmp.ne.s32.totalorder %s102, %s116
      %p118 = scmp.eq.s32.totalorder %s29, 0
      %p119 = por %p117, %p118
      %s121 = sadd.s32 %s120, 1
      %p124 = scmp.eq.s32.totalorder %s23, 1
      %p125 = scmp.ne.s32.totalorder %s120, %s122
      %p126 = scmp.eq.s32.totalorder %s23, 0
      %p127 = por %p125, %p126
      %p128 = scmp.ne.s32.totalorder %s120, %s122
      %p129 = scmp.eq.s32.totalorder %s28, 1
      %p130 = por %p128, %p129
      %p131 = scmp.ne.s32.totalorder %s122, %s123
      %p132 = scmp.eq.s32.totalorder %s28, 0
      %p133 = por %p131, %p132
      %p134 = scmp.ne.s32.totalorder %s122, %s123
      %p135 = scmp.eq.s32.totalorder %s29, 1
      %p136 = por %p134, %p135
      %p138 = scmp.ne.s32.totalorder %s123, %s137
      %p139 = scmp.eq.s32.totalorder %s29, 0
      %p140 = por %p138, %p139
      %s142 = sadd.s32 %s141, 1
      %p145 = scmp.eq.s32.totalorder %s23, 1
      %p146 = scmp.ne.s32.totalorder %s141, %s143
      %p147 = scmp.eq.s32.totalorder %s23, 0
      %p148 = por %p146, %p147
      %p149 = scmp.ne.s32.totalorder %s141, %s143
      %p150 = scmp.eq.s32.totalorder %s28, 1
      %p151 = por %p149, %p150
      %p152 = scmp.ne.s32.totalorder %s143, %s144
      %p153 = scmp.eq.s32.totalorder %s28, 0
      %p154 = por %p152, %p153
      %p155 = scmp.ne.s32.totalorder %s143, %s144
      %p156 = scmp.eq.s32.totalorder %s29, 1
      %p157 = por %p155, %p156
      %p159 = scmp.ne.s32.totalorder %s144, %s158
      %p160 = scmp.eq.s32.totalorder %s29, 0
      %p161 = por %p159, %p160
      %s163 = sadd.s32 %s162, 1
      %p166 = scmp.eq.s32.totalorder %s23, 1
      %p167 = scmp.ne.s32.totalorder %s162, %s164
      %p168 = scmp.eq.s32.totalorder %s23, 0
      %p169 = por %p167, %p168
      %p170 = scmp.ne.s32.totalorder %s162, %s164
      %p171 = scmp.eq.s32.totalorder %s28, 1
      %p172 = por %p170, %p171
      %p173 = scmp.ne.s32.totalorder %s164, %s165
      %p174 = scmp.eq.s32.totalorder %s28, 0
      %p175 = por %p173, %p174
      %p176 = scmp.ne.s32.totalorder %s164, %s165
      %p177 = scmp.eq.s32.totalorder %s29, 1
      %p178 = por %p176, %p177
      %p180 = scmp.ne.s32.totalorder %s165, %s179
      %p181 = scmp.eq.s32.totalorder %s29, 0
      %p182 = por %p180, %p181
      %s184 = sadd.s32 %s183, 1
      %p187 = scmp.eq.s32.totalorder %s23, 1
      %p188 = scmp.ne.s32.totalorder %s183, %s185
      %p189 = scmp.eq.s32.totalorder %s23, 0
      %p190 = por %p188, %p189
      %p191 = scmp.ne.s32.totalorder %s183, %s185
      %p192 = scmp.eq.s32.totalorder %s28, 1
      %p193 = por %p191, %p192
      %p194 = scmp.ne.s32.totalorder %s185, %s186
      %p195 = scmp.eq.s32.totalorder %s28, 0
      %p196 = por %p194, %p195
      %p197 = scmp.ne.s32.totalorder %s185, %s186
      %p198 = scmp.eq.s32.totalorder %s29, 1
      %p199 = por %p197, %p198
      %p201 = scmp.ne.s32.totalorder %s186, %s200
      %p202 = scmp.eq.s32.totalorder %s29, 0
      %p203 = por %p201, %p202
      %s205 = sadd.s32 %s204, 1
      %p208 = scmp.eq.s32.totalorder %s23, 1
      %p209 = scmp.ne.s32.totalorder %s204, %s206
      %p210 = scmp.eq.s32.totalorder %s23, 0
      %p211 = por %p209, %p210
      %p212 = scmp.ne.s32.totalorder %s204, %s206
      %p213 = scmp.eq.s32.totalorder %s28, 1
      %p214 = por %p212, %p213
      %p215 = scmp.ne.s32.totalorder %s206, %s207
      %p216 = scmp.eq.s32.totalorder %s28, 0
      %p217 = por %p215, %p216
      %p218 = scmp.ne.s32.totalorder %s206, %s207
      %p219 = scmp.eq.s32.totalorder %s29, 1
      %p220 = por %p218, %p219
      %p222 = scmp.ne.s32.totalorder %s207, %s221
      %p223 = scmp.eq.s32.totalorder %s29, 0
      %p224 = por %p222, %p223
      %s225 = ssub.s32 %s23, %s30
      %p226 = scmp.eq.s32.totalorder %s225, 0
      %s228 = sadd.s32 %s227, 1
      %s229 = scalar_select %p226, %s227, %s228
      %p232 = pneg %p226
      %p233 = scmp.eq.s32.totalorder %s23, 1
      %p234 = por %p232, %p233
      %p235 = scmp.ne.s32.totalorder %s227, %s230
      %p236 = scmp.eq.s32.totalorder %s23, 0
      %p237 = por %p235, %p236
      %p238 = scmp.ne.s32.totalorder %s227, %s230
      %p239 = scmp.eq.s32.totalorder %s28, 1
      %p240 = por %p238, %p239
      %p241 = scmp.ne.s32.totalorder %s230, %s231
      %p242 = scmp.eq.s32.totalorder %s28, 0
      %p243 = por %p241, %p242
      %p244 = scmp.ne.s32.totalorder %s230, %s231
      %p245 = scmp.eq.s32.totalorder %s29, 1
      %p246 = por %p244, %p245
      %p248 = scmp.ne.s32.totalorder %s231, %s247
      %p249 = scmp.eq.s32.totalorder %s29, 0
      %p250 = por %p248, %p249
      %p251 = scmp.le.s32.totalorder 1, %s23
      %p252 = scmp.lt.s32.totalorder %s23, 3
      %p253 = pnand %p251, %p252
      %p254 = pneg %p253
      // Predicated region
      $region9: #{tpu_custom_call.1} parent=5 // pred_check
        _
      $region10: #{tpu_custom_call.1} parent=5 // pred_check_branch
        %256 = sbr.rel (%p253) target = $region12
      $region11: #{tpu_custom_call.1} parent=5 // pred_region
        %s257 = ssub.s32 %s23, 1
        // Predicated region
        $region13: #{tpu_custom_call.1} parent=11 // pred_check
          %p258 = pneg %p70
        $region14: #{tpu_custom_call.1} parent=11 // pred_check_branch
          %260 = sbr.rel (%p258) target = $region16
        $region15: #{tpu_custom_call.1} parent=11 // pred_region
          %s262 = ssub.s32 512, 512
          %263 = vsyncadd [#allocation6], %s262
          %s264 = sshll.u32 [#allocation5], 4
          %s265 = int_to_ptr.vmem [resolvable:$true] %s264
          %270 = dma.hbm_to_vmem [thread:$0]  %s1, 512, %s265, [#allocation6], 128, 128, 8
        $region16: #{tpu_custom_call.1} parent=11 // pred_fallthru
          _
        // Predicated region
        $region17: #{tpu_custom_call.1} parent=11 // pred_check
          %p271 = pneg %p91
        $region18: #{tpu_custom_call.1} parent=11 // pred_check_branch
          %273 = sbr.rel (%p271) target = $region20
        $region19: #{tpu_custom_call.1} parent=11 // pred_region
          _
        $region20: #{tpu_custom_call.1} parent=11 // pred_fallthru
          _
        // Predicated region
        $region21: #{tpu_custom_call.1} parent=11 // pred_check
          %p274 = pneg %p112
        $region22: #{tpu_custom_call.1} parent=11 // pred_check_branch
          %276 = sbr.rel (%p274) target = $region24
        $region23: #{tpu_custom_call.1} parent=11 // pred_region
          %s278 = ssub.s32 512, 512
          %279 = vsyncadd [#allocation6], %s278
          %s280 = sshll.u32 [#allocation7], 4
          %s281 = int_to_ptr.vmem [resolvable:$true] %s280
          %286 = dma.hbm_to_vmem [thread:$0]  %s3, 512, %s281, [#allocation6], 128, 128, 8
        $region24: #{tpu_custom_call.1} parent=11 // pred_fallthru
          _
        // Predicated region
        $region25: #{tpu_custom_call.1} parent=11 // pred_check
          %p287 = pneg %p133
        $region26: #{tpu_custom_call.1} parent=11 // pred_check_branch
          %289 = sbr.rel (%p287) target = $region28
        $region27: #{tpu_custom_call.1} parent=11 // pred_region
          _
        $region28: #{tpu_custom_call.1} parent=11 // pred_fallthru
          _
        // Predicated region
        $region29: #{tpu_custom_call.1} parent=11 // pred_check
          %p290 = pneg %p154
        $region30: #{tpu_custom_call.1} parent=11 // pred_check_branch
          %292 = sbr.rel (%p290) target = $region32
        $region31: #{tpu_custom_call.1} parent=11 // pred_region
          %s294 = ssub.s32 512, 512
          %295 = vsyncadd [#allocation9], %s294
          %s296 = sshll.u32 [#allocation8], 4
          %s297 = int_to_ptr.vmem [resolvable:$true] %s296
          %302 = dma.hbm_to_vmem [thread:$0]  %s5, 512, %s297, [#allocation9], 128, 128, 8
        $region32: #{tpu_custom_call.1} parent=11 // pred_fallthru
          _
        // Predicated region
        $region33: #{tpu_custom_call.1} parent=11 // pred_check
          %p303 = pneg %p175
        $region34: #{tpu_custom_call.1} parent=11 // pred_check_branch
          %305 = sbr.rel (%p303) target = $region36
        $region35: #{tpu_custom_call.1} parent=11 // pred_region
          _
        $region36: #{tpu_custom_call.1} parent=11 // pred_fallthru
          _
        // Predicated region
        $region37: #{tpu_custom_call.1} parent=11 // pred_check
          %p306 = pneg %p196
        $region38: #{tpu_custom_call.1} parent=11 // pred_check_branch
          %308 = sbr.rel (%p306) target = $region40
        $region39: #{tpu_custom_call.1} parent=11 // pred_region
          %s310 = ssub.s32 512, 512
          %311 = vsyncadd [#allocation9], %s310
          %s312 = sshll.u32 [#allocation10], 4
          %s313 = int_to_ptr.vmem [resolvable:$true] %s312
          %318 = dma.hbm_to_vmem [thread:$0]  %s7, 512, %s313, [#allocation9], 128, 128, 8
        $region40: #{tpu_custom_call.1} parent=11 // pred_fallthru
          _
        // Predicated region
        $region41: #{tpu_custom_call.1} parent=11 // pred_check
          %p319 = pneg %p217
        $region42: #{tpu_custom_call.1} parent=11 // pred_check_branch
          %321 = sbr.rel (%p319) target = $region44
        $region43: #{tpu_custom_call.1} parent=11 // pred_region
          _
        $region44: #{tpu_custom_call.1} parent=11 // pred_fallthru
          _
      $region12: #{tpu_custom_call.1} parent=5 // pred_fallthru
        _
      %p322 = scmp.lt.s32.totalorder %s23, 2
      // Predicated region
      $region45: #{tpu_custom_call.1} parent=5 // pred_check
        %p323 = pneg %p322
      $region46: #{tpu_custom_call.1} parent=5 // pred_check_branch
        %325 = sbr.rel (%p323) target = $region48
      $region47: #{tpu_custom_call.1} parent=5 // pred_region
        // Predicated region
        $region49: #{tpu_custom_call.1} parent=47 // pred_check
          %p326 = pneg %p43
        $region50: #{tpu_custom_call.1} parent=47 // pred_check_branch
          %328 = sbr.rel (%p326) target = $region52
        $region51: #{tpu_custom_call.1} parent=47 // pred_region
          %s329 = sand.u32 %s33, 1
          %s330 = scalar_lea.sflag [#allocation3], %s329
          %s331 = sand.u32 %s33, 1
          %s332 = smul.addr %s331, 8
          %s333 = scalar_lea.vmem [#allocation2], %s332
          %s335 = ssub.s32 128, 128
          %336 = vsyncadd %s330, %s335
          %s337 = smul.addr %s23, 128
          %s338 = scalar_lea.hbm %s0, %s337
          %s340 = sshll.u32 %s333, 4
          %s341 = int_to_ptr.vmem [resolvable:$true] %s340
          %343 = dma.hbm_to_vmem [thread:$0]  %s338, 128, %s341, %s330
        $region52: #{tpu_custom_call.1} parent=47 // pred_fallthru
          _
      $region48: #{tpu_custom_call.1} parent=5 // pred_fallthru
        _
      %p344 = scmp.le.s32.totalorder 1, %s23
      %p345 = scmp.lt.s32.totalorder %s23, 3
      %p346 = pnand %p344, %p345
      %p347 = pneg %p346
      // Predicated region
      $region53: #{tpu_custom_call.1} parent=5 // pred_check
        _
      $region54: #{tpu_custom_call.1} parent=5 // pred_check_branch
        %349 = sbr.rel (%p346) target = $region56
      $region55: #{tpu_custom_call.1} parent=5 // pred_region
        %s350 = ssub.s32 %s23, 1
        %s351 = sand.u32 %s36, 1
        %s352 = scalar_lea.sflag [#allocation3], %s351
        %s353 = sand.u32 %s36, 1
        %s354 = smul.addr %s353, 8
        %s355 = scalar_lea.vmem [#allocation2], %s354
        // Predicated region
        $region57: #{tpu_custom_call.1} parent=55 // pred_check
          %p356 = pneg %p49
        $region58: #{tpu_custom_call.1} parent=55 // pred_check_branch
          %358 = sbr.rel (%p356) target = $region60
        $region59: #{tpu_custom_call.1} parent=55 // pred_region
          %359 = dma.done %s352, 128
        $region60: #{tpu_custom_call.1} parent=55 // pred_fallthru
          _
        // Predicated region
        $region61: #{tpu_custom_call.1} parent=55 // pred_check
          %p360 = pneg %p70
        $region62: #{tpu_custom_call.1} parent=55 // pred_check_branch
          %362 = sbr.rel (%p360) target = $region64
        $region63: #{tpu_custom_call.1} parent=55 // pred_region
          %363 = dma.done [#allocation6], 512
        $region64: #{tpu_custom_call.1} parent=55 // pred_fallthru
          _
        // Predicated region
        $region65: #{tpu_custom_call.1} parent=55 // pred_check
          %p364 = pneg %p112
        $region66: #{tpu_custom_call.1} parent=55 // pred_check_branch
          %366 = sbr.rel (%p364) target = $region68
        $region67: #{tpu_custom_call.1} parent=55 // pred_region
          %367 = dma.done [#allocation6], 512
        $region68: #{tpu_custom_call.1} parent=55 // pred_fallthru
          _
        // Predicated region
        $region69: #{tpu_custom_call.1} parent=55 // pred_check
          %p368 = pneg %p154
        $region70: #{tpu_custom_call.1} parent=55 // pred_check_branch
          %370 = sbr.rel (%p368) target = $region72
        $region71: #{tpu_custom_call.1} parent=55 // pred_region
          %371 = dma.done [#allocation9], 512
        $region72: #{tpu_custom_call.1} parent=55 // pred_fallthru
          _
        // Predicated region
        $region73: #{tpu_custom_call.1} parent=55 // pred_check
          %p372 = pneg %p196
        $region74: #{tpu_custom_call.1} parent=55 // pred_check_branch
          %374 = sbr.rel (%p372) target = $region76
        $region75: #{tpu_custom_call.1} parent=55 // pred_region
          %375 = dma.done [#allocation9], 512
        $region76: #{tpu_custom_call.1} parent=55 // pred_fallthru
          _
        %s376 = sand.u32 %s36, 1
        %s377 = scalar_lea.sflag [#allocation3], %s376
        %s378 = sand.u32 %s36, 1
        %s379 = smul.addr %s378, 8
        %s380 = scalar_lea.vmem [#allocation2], %s379
        %p381 = pneg %p49
        %p382 = pneg %p46
        %p383 = pneg %p70
        %p384 = pneg %p67
        %p385 = pneg %p91
        %p386 = pneg %p88
        %p387 = pneg %p112
        %p388 = pneg %p109
        %p389 = pneg %p133
        %p390 = pneg %p130
        %p391 = pneg %p154
        %p392 = pneg %p151
        %p393 = pneg %p175
        %p394 = pneg %p172
        %p395 = pneg %p196
        %p396 = pneg %p193
        %p397 = pneg %p217
        %p398 = pneg %p214
        %p399 = pneg %p243
        %p400 = pneg %p240
        %s401 = sand.u32 %s230, 1
        %s402 = scalar_lea.sflag [#allocation4], %s401
        %s403 = sand.u32 %s230, 1
        %s404 = smul.addr %s403, 8
        %s405 = scalar_lea.vmem [#allocation11], %s404
        %v406 = vld [vmem:[%s355] sm:$0xff]
        %v407 = vld [vmem:[#allocation5] sm:$0xff]
        %v408 = vld [vmem:[#allocation5 + $0x8] sm:$0xff]
        %v409 = vld [vmem:[#allocation5 + $0x10] sm:$0xff]
        %v410 = vld [vmem:[#allocation5 + $0x18] sm:$0xff]
        %v411 = vld [vmem:[%s2] sm:$0x1]
        %v413 = vlaneseq
        %v414 = vshrl.u32 %v413, 7
        %v415 = vsub.s32 0, %v414
        %v416 = vrot.slane %v411, %v415
        %vm418 = vcmask 261120
        %v420 = vsel %vm418, %v406, 0
        %422 = vmatprep.subr.mxu0 0.0
        %423 = vmatpush1.msra.mxu0 %v407
        %424 = vmatprep.subr.mxu0 0.0
        %425 = vmatpush1.msra.mxu0 %v408
        %426 = vmatprep.subr.mxu0 0.0
        %427 = vmatpush1.msra.mxu0 %v409
        %428 = vmatprep.subr.mxu0 0.0
        %429 = vmatpush1.msra.mxu0 %v410
        %430 = vmatprep.subr.mxu0 0.0
        %431 = vmatpush1.msra.mxu0 0.0
        %432 = vmatprep.subr.mxu0 0.0
        %433 = vmatpush1.msra.mxu0 0.0
        %434 = vmatprep.subr.mxu0 0.0
        %435 = vmatpush1.msra.mxu0 0.0
        %436 = vmatprep.subr.mxu0 0.0
        %437 = vmatpush1.msra.mxu0 0.0
        %438 = vmatprep.subr.mxu0 0.0
        %439 = vmatpush1.msra.mxu0 0.0
        %440 = vmatprep.subr.mxu0 0.0
        %441 = vmatpush1.msra.mxu0 0.0
        %442 = vmatprep.subr.mxu0 0.0
        %443 = vmatpush1.msra.mxu0 0.0
        %444 = vmatprep.subr.mxu0 0.0
        %445 = vmatpush1.msra.mxu0 0.0
        %446 = vmatprep.subr.mxu0 0.0
        %447 = vmatpush1.msra.mxu0 0.0
        %448 = vmatprep.subr.mxu0 0.0
        %449 = vmatpush1.msra.mxu0 0.0
        %450 = vmatprep.subr.mxu0 0.0
        %451 = vmatpush1.msra.mxu0 0.0
        %452 = vmatprep.subr.mxu0 0.0
        %453 = vmatpush1.msra.mxu0 0.0
        %454 = vmatprep.subr.mxu0 0.0
        %455 = vmatpush1.msra.mxu0 0.0
        %456 = vmatprep.subr.mxu0 0.0
        %457 = vmatpush1.msra.mxu0 0.0
        %458 = vmatprep.subr.mxu0 0.0
        %459 = vmatpush1.msra.mxu0 0.0
        %460 = vmatprep.subr.mxu0 0.0
        %461 = vmatpush1.msra.mxu0 0.0
        %462 = vmatprep.subr.mxu0 0.0
        %463 = vmatpush1.msra.mxu0 0.0
        %464 = vmatprep.subr.mxu0 0.0
        %465 = vmatpush1.msra.mxu0 0.0
        %466 = vmatprep.subr.mxu0 0.0
        %467 = vmatpush1.msra.mxu0 0.0
        %468 = vmatprep.subr.mxu0 0.0
        %469 = vmatpush1.msra.mxu0 0.0
        %470 = vmatprep.subr.mxu0 0.0
        %471 = vmatpush1.msra.mxu0 0.0
        %472 = vmatprep.subr.mxu0 0.0
        %473 = vmatpush1.msra.mxu0 0.0
        %474 = vmatprep.subr.mxu0 0.0
        %475 = vmatpush1.msra.mxu0 0.0
        %476 = vmatprep.subr.mxu0 0.0
        %477 = vmatpush1.msra.mxu0 0.0
        %478 = vmatprep.subr.mxu0 0.0
        %479 = vmatpush1.msra.mxu0 0.0
        %480 = vmatprep.subr.mxu0 0.0
        %481 = vmatpush1.msra.mxu0 0.0
        %482 = vmatprep.subr.mxu0 0.0
        %483 = vmatpush1.msra.mxu0 0.0
        %484 = vmatprep.subr.mxu0 0.0
        %485 = vmatpush1.msra.mxu0 0.0
        %486 = vmatprep.mubr.f32.mxu0 0.0
        %487 = vmatmul.mubr.f32.gmra.mrb[0].mxu0 %v420
        %v488 = vpop.f32.mrb[0].mxu0
        %v489 = vadd.f32 %v416, %v488
        %v490 = vpop.f32.mrb[0].mxu0
        %491 = vdwg.mxu0
        %v492 = vld [vmem:[#allocation7] sm:$0xff]
        %v493 = vld [vmem:[#allocation7 + $0x8] sm:$0xff]
        %v494 = vld [vmem:[#allocation7 + $0x10] sm:$0xff]
        %v495 = vld [vmem:[#allocation7 + $0x18] sm:$0xff]
        %v496 = vld [vmem:[%s4] sm:$0x1]
        %v498 = vlaneseq
        %v499 = vshrl.u32 %v498, 7
        %v500 = vsub.s32 0, %v499
        %v501 = vrot.slane %v496, %v500
        %503 = vmatprep.subr.mxu0 0.0
        %504 = vmatpush1.msra.mxu0 %v492
        %505 = vmatprep.subr.mxu0 0.0
        %506 = vmatpush1.msra.mxu0 %v493
        %507 = vmatprep.subr.mxu0 0.0
        %508 = vmatpush1.msra.mxu0 %v494
        %509 = vmatprep.subr.mxu0 0.0
        %510 = vmatpush1.msra.mxu0 %v495
        %511 = vmatprep.subr.mxu0 0.0
        %512 = vmatpush1.msra.mxu0 0.0
        %513 = vmatprep.subr.mxu0 0.0
        %514 = vmatpush1.msra.mxu0 0.0
        %515 = vmatprep.subr.mxu0 0.0
        %516 = vmatpush1.msra.mxu0 0.0
        %517 = vmatprep.subr.mxu0 0.0
        %518 = vmatpush1.msra.mxu0 0.0
        %519 = vmatprep.subr.mxu0 0.0
        %520 = vmatpush1.msra.mxu0 0.0
        %521 = vmatprep.subr.mxu0 0.0
        %522 = vmatpush1.msra.mxu0 0.0
        %523 = vmatprep.subr.mxu0 0.0
        %524 = vmatpush1.msra.mxu0 0.0
        %525 = vmatprep.subr.mxu0 0.0
        %526 = vmatpush1.msra.mxu0 0.0
        %527 = vmatprep.subr.mxu0 0.0
        %528 = vmatpush1.msra.mxu0 0.0
        %529 = vmatprep.subr.mxu0 0.0
        %530 = vmatpush1.msra.mxu0 0.0
        %531 = vmatprep.subr.mxu0 0.0
        %532 = vmatpush1.msra.mxu0 0.0
        %533 = vmatprep.subr.mxu0 0.0
        %534 = vmatpush1.msra.mxu0 0.0
        %535 = vmatprep.subr.mxu0 0.0
        %536 = vmatpush1.msra.mxu0 0.0
        %537 = vmatprep.subr.mxu0 0.0
        %538 = vmatpush1.msra.mxu0 0.0
        %539 = vmatprep.subr.mxu0 0.0
        %540 = vmatpush1.msra.mxu0 0.0
        %541 = vmatprep.subr.mxu0 0.0
        %542 = vmatpush1.msra.mxu0 0.0
        %543 = vmatprep.subr.mxu0 0.0
        %544 = vmatpush1.msra.mxu0 0.0
        %545 = vmatprep.subr.mxu0 0.0
        %546 = vmatpush1.msra.mxu0 0.0
        %547 = vmatprep.subr.mxu0 0.0
        %548 = vmatpush1.msra.mxu0 0.0
        %549 = vmatprep.subr.mxu0 0.0
        %550 = vmatpush1.msra.mxu0 0.0
        %551 = vmatprep.subr.mxu0 0.0
        %552 = vmatpush1.msra.mxu0 0.0
        %553 = vmatprep.subr.mxu0 0.0
        %554 = vmatpush1.msra.mxu0 0.0
        %555 = vmatprep.subr.mxu0 0.0
        %556 = vmatpush1.msra.mxu0 0.0
        %557 = vmatprep.subr.mxu0 0.0
        %558 = vmatpush1.msra.mxu0 0.0
        %559 = vmatprep.subr.mxu0 0.0
        %560 = vmatpush1.msra.mxu0 0.0
        %561 = vmatprep.subr.mxu0 0.0
        %562 = vmatpush1.msra.mxu0 0.0
        %563 = vmatprep.subr.mxu0 0.0
        %564 = vmatpush1.msra.mxu0 0.0
        %565 = vmatprep.subr.mxu0 0.0
        %566 = vmatpush1.msra.mxu0 0.0
        %567 = vmatprep.mubr.f32.mxu0 0.0
        %568 = vmatmul.mubr.f32.gmra.mrb[0].mxu0 %v420
        %v569 = vpop.f32.mrb[0].mxu0
        %v570 = vadd.f32 %v501, %v569
        %v571 = vpop.f32.mrb[0].mxu0
        %572 = vdwg.mxu0
        %v573 = vld [vmem:[#allocation8] sm:$0xff]
        %v574 = vld [vmem:[#allocation8 + $0x8] sm:$0xff]
        %v575 = vld [vmem:[#allocation8 + $0x10] sm:$0xff]
        %v576 = vld [vmem:[#allocation8 + $0x18] sm:$0xff]
        %v577 = vld [vmem:[%s6] sm:$0x1]
        %v579 = vlaneseq
        %v580 = vshrl.u32 %v579, 7
        %v581 = vsub.s32 0, %v580
        %v582 = vrot.slane %v577, %v581
        %584 = vmatprep.subr.mxu0 0.0
        %585 = vmatpush1.msra.mxu0 %v573
        %586 = vmatprep.subr.mxu0 0.0
        %587 = vmatpush1.msra.mxu0 %v574
        %588 = vmatprep.subr.mxu0 0.0
        %589 = vmatpush1.msra.mxu0 %v575
        %590 = vmatprep.subr.mxu0 0.0
        %591 = vmatpush1.msra.mxu0 %v576
        %592 = vmatprep.subr.mxu0 0.0
        %593 = vmatpush1.msra.mxu0 0.0
        %594 = vmatprep.subr.mxu0 0.0
        %595 = vmatpush1.msra.mxu0 0.0
        %596 = vmatprep.subr.mxu0 0.0
        %597 = vmatpush1.msra.mxu0 0.0
        %598 = vmatprep.subr.mxu0 0.0
        %599 = vmatpush1.msra.mxu0 0.0
        %600 = vmatprep.subr.mxu0 0.0
        %601 = vmatpush1.msra.mxu0 0.0
        %602 = vmatprep.subr.mxu0 0.0
        %603 = vmatpush1.msra.mxu0 0.0
        %604 = vmatprep.subr.mxu0 0.0
        %605 = vmatpush1.msra.mxu0 0.0
        %606 = vmatprep.subr.mxu0 0.0
        %607 = vmatpush1.msra.mxu0 0.0
        %608 = vmatprep.subr.mxu0 0.0
        %609 = vmatpush1.msra.mxu0 0.0
        %610 = vmatprep.subr.mxu0 0.0
        %611 = vmatpush1.msra.mxu0 0.0
        %612 = vmatprep.subr.mxu0 0.0
        %613 = vmatpush1.msra.mxu0 0.0
        %614 = vmatprep.subr.mxu0 0.0
        %615 = vmatpush1.msra.mxu0 0.0
        %616 = vmatprep.subr.mxu0 0.0
        %617 = vmatpush1.msra.mxu0 0.0
        %618 = vmatprep.subr.mxu0 0.0
        %619 = vmatpush1.msra.mxu0 0.0
        %620 = vmatprep.subr.mxu0 0.0
        %621 = vmatpush1.msra.mxu0 0.0
        %622 = vmatprep.subr.mxu0 0.0
        %623 = vmatpush1.msra.mxu0 0.0
        %624 = vmatprep.subr.mxu0 0.0
        %625 = vmatpush1.msra.mxu0 0.0
        %626 = vmatprep.subr.mxu0 0.0
        %627 = vmatpush1.msra.mxu0 0.0
        %628 = vmatprep.subr.mxu0 0.0
        %629 = vmatpush1.msra.mxu0 0.0
        %630 = vmatprep.subr.mxu0 0.0
        %631 = vmatpush1.msra.mxu0 0.0
        %632 = vmatprep.subr.mxu0 0.0
        %633 = vmatpush1.msra.mxu0 0.0
        %634 = vmatprep.subr.mxu0 0.0
        %635 = vmatpush1.msra.mxu0 0.0
        %636 = vmatprep.subr.mxu0 0.0
        %637 = vmatpush1.msra.mxu0 0.0
        %638 = vmatprep.subr.mxu0 0.0
        %639 = vmatpush1.msra.mxu0 0.0
        %640 = vmatprep.subr.mxu0 0.0
        %641 = vmatpush1.msra.mxu0 0.0
        %642 = vmatprep.subr.mxu0 0.0
        %643 = vmatpush1.msra.mxu0 0.0
        %644 = vmatprep.subr.mxu0 0.0
        %645 = vmatpush1.msra.mxu0 0.0
        %646 = vmatprep.subr.mxu0 0.0
        %647 = vmatpush1.msra.mxu0 0.0
        %648 = vmatprep.mubr.f32.mxu0 0.0
        %649 = vmatmul.mubr.f32.gmra.mrb[0].mxu0 %v420
        %v650 = vpop.f32.mrb[0].mxu0
        %v651 = vadd.f32 %v582, %v650
        %v652 = vpop.f32.mrb[0].mxu0
        %653 = vdwg.mxu0
        %vm654 = vcmask 64512
        %v656 = vsel %vm654, %v489, 0
        %v659 = vsel %vm654, %v570, 0
        %661 = vmatprep.subr.mxu0 0.0
        %662 = vmatpush1.xpose.msra.mxu0 %v659
        %663 = vmatprep.subr.mxu0 0.0
        %664 = vmatpush1.xpose.msra.mxu0 0.0
        %665 = vmatprep.subr.mxu0 0.0
        %666 = vmatpush1.xpose.msra.mxu0 0.0
        %667 = vmatprep.subr.mxu0 0.0
        %668 = vmatpush1.xpose.msra.mxu0 0.0
        %669 = vmatprep.subr.mxu0 0.0
        %670 = vmatpush1.xpose.msra.mxu0 0.0
        %671 = vmatprep.subr.mxu0 0.0
        %672 = vmatpush1.xpose.msra.mxu0 0.0
        %673 = vmatprep.subr.mxu0 0.0
        %674 = vmatpush1.xpose.msra.mxu0 0.0
        %675 = vmatprep.subr.mxu0 0.0
        %676 = vmatpush1.xpose.msra.mxu0 0.0
        %677 = vmatprep.subr.mxu0 0.0
        %678 = vmatpush1.xpose.msra.mxu0 0.0
        %679 = vmatprep.subr.mxu0 0.0
        %680 = vmatpush1.xpose.msra.mxu0 0.0
        %681 = vmatprep.subr.mxu0 0.0
        %682 = vmatpush1.xpose.msra.mxu0 0.0
        %683 = vmatprep.subr.mxu0 0.0
        %684 = vmatpush1.xpose.msra.mxu0 0.0
        %685 = vmatprep.subr.mxu0 0.0
        %686 = vmatpush1.xpose.msra.mxu0 0.0
        %687 = vmatprep.subr.mxu0 0.0
        %688 = vmatpush1.xpose.msra.mxu0 0.0
        %689 = vmatprep.subr.mxu0 0.0
        %690 = vmatpush1.xpose.msra.mxu0 0.0
        %691 = vmatprep.subr.mxu0 0.0
        %692 = vmatpush1.xpose.msra.mxu0 0.0
        %693 = vmatprep.subr.mxu0 0.0
        %694 = vmatpush1.xpose.msra.mxu0 0.0
        %695 = vmatprep.subr.mxu0 0.0
        %696 = vmatpush1.xpose.msra.mxu0 0.0
        %697 = vmatprep.subr.mxu0 0.0
        %698 = vmatpush1.xpose.msra.mxu0 0.0
        %699 = vmatprep.subr.mxu0 0.0
        %700 = vmatpush1.xpose.msra.mxu0 0.0
        %701 = vmatprep.subr.mxu0 0.0
        %702 = vmatpush1.xpose.msra.mxu0 0.0
        %703 = vmatprep.subr.mxu0 0.0
        %704 = vmatpush1.xpose.msra.mxu0 0.0
        %705 = vmatprep.subr.mxu0 0.0
        %706 = vmatpush1.xpose.msra.mxu0 0.0
        %707 = vmatprep.subr.mxu0 0.0
        %708 = vmatpush1.xpose.msra.mxu0 0.0
        %709 = vmatprep.subr.mxu0 0.0
        %710 = vmatpush1.xpose.msra.mxu0 0.0
        %711 = vmatprep.subr.mxu0 0.0
        %712 = vmatpush1.xpose.msra.mxu0 0.0
        %713 = vmatprep.subr.mxu0 0.0
        %714 = vmatpush1.xpose.msra.mxu0 0.0
        %715 = vmatprep.subr.mxu0 0.0
        %716 = vmatpush1.xpose.msra.mxu0 0.0
        %717 = vmatprep.subr.mxu0 0.0
        %718 = vmatpush1.xpose.msra.mxu0 0.0
        %719 = vmatprep.subr.mxu0 0.0
        %720 = vmatpush1.xpose.msra.mxu0 0.0
        %721 = vmatprep.subr.mxu0 0.0
        %722 = vmatpush1.xpose.msra.mxu0 0.0
        %723 = vmatprep.subr.mxu0 0.0
        %724 = vmatpush1.xpose.msra.mxu0 0.0
        %725 = vmatprep.mubr.f32.mxu0 0.0
        %726 = vmatmul.mubr.f32.gmra.mrb[0].mxu0 %v656
        %v727 = vpop.f32.mrb[0].mxu0
        %v728 = vadd.f32 0.0, %v727
        %v729 = vpop.f32.mrb[0].mxu0
        %730 = vdwg.mxu0
        %v731 = vsel %vm654, %v728, -inf
        %732 = vmax.xlane.f32.xlu0 %v731
        %v733 = vpop.xlane.xlu0 %732
        %v734 = vsub.f32 %v728, %v733
        %v735 = vmul.f32 %v734, 1.442695
        %v736 = vpow.pop %v735
        %v737 = vsel %vm654, %v736, 0.0
        %738 = vadd.xlane.f32.xlu0 %v737
        %v739 = vpop.xlane.xlu0 %738
        %v741 = vsel %vm654, %v736, 0
        %743 = vmatprep.subr.mxu0 0.0
        %744 = vmatpush1.msra.mxu0 %v651
        %745 = vmatprep.subr.mxu0 0.0
        %746 = vmatpush1.msra.mxu0 0.0
        %747 = vmatprep.subr.mxu0 0.0
        %748 = vmatpush1.msra.mxu0 0.0
        %749 = vmatprep.subr.mxu0 0.0
        %750 = vmatpush1.msra.mxu0 0.0
        %751 = vmatprep.subr.mxu0 0.0
        %752 = vmatpush1.msra.mxu0 0.0
        %753 = vmatprep.subr.mxu0 0.0
        %754 = vmatpush1.msra.mxu0 0.0
        %755 = vmatprep.subr.mxu0 0.0
        %756 = vmatpush1.msra.mxu0 0.0
        %757 = vmatprep.subr.mxu0 0.0
        %758 = vmatpush1.msra.mxu0 0.0
        %759 = vmatprep.subr.mxu0 0.0
        %760 = vmatpush1.msra.mxu0 0.0
        %761 = vmatprep.subr.mxu0 0.0
        %762 = vmatpush1.msra.mxu0 0.0
        %763 = vmatprep.subr.mxu0 0.0
        %764 = vmatpush1.msra.mxu0 0.0
        %765 = vmatprep.subr.mxu0 0.0
        %766 = vmatpush1.msra.mxu0 0.0
        %767 = vmatprep.subr.mxu0 0.0
        %768 = vmatpush1.msra.mxu0 0.0
        %769 = vmatprep.subr.mxu0 0.0
        %770 = vmatpush1.msra.mxu0 0.0
        %771 = vmatprep.subr.mxu0 0.0
        %772 = vmatpush1.msra.mxu0 0.0
        %773 = vmatprep.subr.mxu0 0.0
        %774 = vmatpush1.msra.mxu0 0.0
        %775 = vmatprep.subr.mxu0 0.0
        %776 = vmatpush1.msra.mxu0 0.0
        %777 = vmatprep.subr.mxu0 0.0
        %778 = vmatpush1.msra.mxu0 0.0
        %779 = vmatprep.subr.mxu0 0.0
        %780 = vmatpush1.msra.mxu0 0.0
        %781 = vmatprep.subr.mxu0 0.0
        %782 = vmatpush1.msra.mxu0 0.0
        %783 = vmatprep.subr.mxu0 0.0
        %784 = vmatpush1.msra.mxu0 0.0
        %785 = vmatprep.subr.mxu0 0.0
        %786 = vmatpush1.msra.mxu0 0.0
        %787 = vmatprep.subr.mxu0 0.0
        %788 = vmatpush1.msra.mxu0 0.0
        %789 = vmatprep.subr.mxu0 0.0
        %790 = vmatpush1.msra.mxu0 0.0
        %791 = vmatprep.subr.mxu0 0.0
        %792 = vmatpush1.msra.mxu0 0.0
        %793 = vmatprep.subr.mxu0 0.0
        %794 = vmatpush1.msra.mxu0 0.0
        %795 = vmatprep.subr.mxu0 0.0
        %796 = vmatpush1.msra.mxu0 0.0
        %797 = vmatprep.subr.mxu0 0.0
        %798 = vmatpush1.msra.mxu0 0.0
        %799 = vmatprep.subr.mxu0 0.0
        %800 = vmatpush1.msra.mxu0 0.0
        %801 = vmatprep.subr.mxu0 0.0
        %802 = vmatpush1.msra.mxu0 0.0
        %803 = vmatprep.subr.mxu0 0.0
        %804 = vmatpush1.msra.mxu0 0.0
        %805 = vmatprep.subr.mxu0 0.0
        %806 = vmatpush1.msra.mxu0 0.0
        %807 = vmatprep.mubr.f32.mxu0 0.0
        %808 = vmatmul.mubr.f32.gmra.mrb[0].mxu0 %v741
        %v809 = vpop.f32.mrb[0].mxu0
        %v810 = vadd.f32 0.0, %v809
        %v811 = vpop.f32.mrb[0].mxu0
        %812 = vdwg.mxu0
        %v813 = vrcp.pop %v739
        %v814 = vmul.f32 %v810, %v813
        %815 = vrot.lane.b32.xlu0 %v489, 120
        %v816 = vpop.permute.xlu0 %815
        %817 = vrot.lane.b32.xlu0 %v570, 120
        %v818 = vpop.permute.xlu0 %817
        %v819 = vsel %vm654, %v816, 0
        %v821 = vsel %vm654, %v818, 0
        %823 = vmatprep.subr.mxu0 0.0
        %824 = vmatpush1.xpose.msra.mxu0 %v821
        %825 = vmatprep.subr.mxu0 0.0
        %826 = vmatpush1.xpose.msra.mxu0 0.0
        %827 = vmatprep.subr.mxu0 0.0
        %828 = vmatpush1.xpose.msra.mxu0 0.0
        %829 = vmatprep.subr.mxu0 0.0
        %830 = vmatpush1.xpose.msra.mxu0 0.0
        %831 = vmatprep.subr.mxu0 0.0
        %832 = vmatpush1.xpose.msra.mxu0 0.0
        %833 = vmatprep.subr.mxu0 0.0
        %834 = vmatpush1.xpose.msra.mxu0 0.0
        %835 = vmatprep.subr.mxu0 0.0
        %836 = vmatpush1.xpose.msra.mxu0 0.0
        %837 = vmatprep.subr.mxu0 0.0
        %838 = vmatpush1.xpose.msra.mxu0 0.0
        %839 = vmatprep.subr.mxu0 0.0
        %840 = vmatpush1.xpose.msra.mxu0 0.0
        %841 = vmatprep.subr.mxu0 0.0
        %842 = vmatpush1.xpose.msra.mxu0 0.0
        %843 = vmatprep.subr.mxu0 0.0
        %844 = vmatpush1.xpose.msra.mxu0 0.0
        %845 = vmatprep.subr.mxu0 0.0
        %846 = vmatpush1.xpose.msra.mxu0 0.0
        %847 = vmatprep.subr.mxu0 0.0
        %848 = vmatpush1.xpose.msra.mxu0 0.0
        %849 = vmatprep.subr.mxu0 0.0
        %850 = vmatpush1.xpose.msra.mxu0 0.0
        %851 = vmatprep.subr.mxu0 0.0
        %852 = vmatpush1.xpose.msra.mxu0 0.0
        %853 = vmatprep.subr.mxu0 0.0
        %854 = vmatpush1.xpose.msra.mxu0 0.0
        %855 = vmatprep.subr.mxu0 0.0
        %856 = vmatpush1.xpose.msra.mxu0 0.0
        %857 = vmatprep.subr.mxu0 0.0
        %858 = vmatpush1.xpose.msra.mxu0 0.0
        %859 = vmatprep.subr.mxu0 0.0
        %860 = vmatpush1.xpose.msra.mxu0 0.0
        %861 = vmatprep.subr.mxu0 0.0
        %862 = vmatpush1.xpose.msra.mxu0 0.0
        %863 = vmatprep.subr.mxu0 0.0
        %864 = vmatpush1.xpose.msra.mxu0 0.0
        %865 = vmatprep.subr.mxu0 0.0
        %866 = vmatpush1.xpose.msra.mxu0 0.0
        %867 = vmatprep.subr.mxu0 0.0
        %868 = vmatpush1.xpose.msra.mxu0 0.0
        %869 = vmatprep.subr.mxu0 0.0
        %870 = vmatpush1.xpose.msra.mxu0 0.0
        %871 = vmatprep.subr.mxu0 0.0
        %872 = vmatpush1.xpose.msra.mxu0 0.0
        %873 = vmatprep.subr.mxu0 0.0
        %874 = vmatpush1.xpose.msra.mxu0 0.0
        %875 = vmatprep.subr.mxu0 0.0
        %876 = vmatpush1.xpose.msra.mxu0 0.0
        %877 = vmatprep.subr.mxu0 0.0
        %878 = vmatpush1.xpose.msra.mxu0 0.0
        %879 = vmatprep.subr.mxu0 0.0
        %880 = vmatpush1.xpose.msra.mxu0 0.0
        %881 = vmatprep.subr.mxu0 0.0
        %882 = vmatpush1.xpose.msra.mxu0 0.0
        %883 = vmatprep.subr.mxu0 0.0
        %884 = vmatpush1.xpose.msra.mxu0 0.0
        %885 = vmatprep.subr.mxu0 0.0
        %886 = vmatpush1.xpose.msra.mxu0 0.0
        %887 = vmatprep.mubr.f32.mxu0 0.0
        %888 = vmatmul.mubr.f32.gmra.mrb[0].mxu0 %v819
        %v889 = vpop.f32.mrb[0].mxu0
        %v890 = vadd.f32 0.0, %v889
        %v891 = vpop.f32.mrb[0].mxu0
        %892 = vdwg.mxu0
        %v893 = vsel %vm654, %v890, -inf
        %894 = vmax.xlane.f32.xlu0 %v893
        %v895 = vpop.xlane.xlu0 %894
        %v896 = vsub.f32 %v890, %v895
        %v897 = vmul.f32 %v896, 1.442695
        %v898 = vpow.pop %v897
        %v899 = vsel %vm654, %v898, 0.0
        %900 = vadd.xlane.f32.xlu0 %v899
        %v901 = vpop.xlane.xlu0 %900
        %903 = vrot.lane.b32.xlu0 %v651, 120
        %v904 = vpop.permute.xlu0 %903
        %v907 = vsel %vm654, %v898, 0
        %909 = vmatprep.subr.mxu0 0.0
        %910 = vmatpush1.msra.mxu0 %v904
        %911 = vmatprep.subr.mxu0 0.0
        %912 = vmatpush1.msra.mxu0 0.0
        %913 = vmatprep.subr.mxu0 0.0
        %914 = vmatpush1.msra.mxu0 0.0
        %915 = vmatprep.subr.mxu0 0.0
        %916 = vmatpush1.msra.mxu0 0.0
        %917 = vmatprep.subr.mxu0 0.0
        %918 = vmatpush1.msra.mxu0 0.0
        %919 = vmatprep.subr.mxu0 0.0
        %920 = vmatpush1.msra.mxu0 0.0
        %921 = vmatprep.subr.mxu0 0.0
        %922 = vmatpush1.msra.mxu0 0.0
        %923 = vmatprep.subr.mxu0 0.0
        %924 = vmatpush1.msra.mxu0 0.0
        %925 = vmatprep.subr.mxu0 0.0
        %926 = vmatpush1.msra.mxu0 0.0
        %927 = vmatprep.subr.mxu0 0.0
        %928 = vmatpush1.msra.mxu0 0.0
        %929 = vmatprep.subr.mxu0 0.0
        %930 = vmatpush1.msra.mxu0 0.0
        %931 = vmatprep.subr.mxu0 0.0
        %932 = vmatpush1.msra.mxu0 0.0
        %933 = vmatprep.subr.mxu0 0.0
        %934 = vmatpush1.msra.mxu0 0.0
        %935 = vmatprep.subr.mxu0 0.0
        %936 = vmatpush1.msra.mxu0 0.0
        %937 = vmatprep.subr.mxu0 0.0
        %938 = vmatpush1.msra.mxu0 0.0
        %939 = vmatprep.subr.mxu0 0.0
        %940 = vmatpush1.msra.mxu0 0.0
        %941 = vmatprep.subr.mxu0 0.0
        %942 = vmatpush1.msra.mxu0 0.0
        %943 = vmatprep.subr.mxu0 0.0
        %944 = vmatpush1.msra.mxu0 0.0
        %945 = vmatprep.subr.mxu0 0.0
        %946 = vmatpush1.msra.mxu0 0.0
        %947 = vmatprep.subr.mxu0 0.0
        %948 = vmatpush1.msra.mxu0 0.0
        %949 = vmatprep.subr.mxu0 0.0
        %950 = vmatpush1.msra.mxu0 0.0
        %951 = vmatprep.subr.mxu0 0.0
        %952 = vmatpush1.msra.mxu0 0.0
        %953 = vmatprep.subr.mxu0 0.0
        %954 = vmatpush1.msra.mxu0 0.0
        %955 = vmatprep.subr.mxu0 0.0
        %956 = vmatpush1.msra.mxu0 0.0
        %957 = vmatprep.subr.mxu0 0.0
        %958 = vmatpush1.msra.mxu0 0.0
        %959 = vmatprep.subr.mxu0 0.0
        %960 = vmatpush1.msra.mxu0 0.0
        %961 = vmatprep.subr.mxu0 0.0
        %962 = vmatpush1.msra.mxu0 0.0
        %963 = vmatprep.subr.mxu0 0.0
        %964 = vmatpush1.msra.mxu0 0.0
        %965 = vmatprep.subr.mxu0 0.0
        %966 = vmatpush1.msra.mxu0 0.0
        %967 = vmatprep.subr.mxu0 0.0
        %968 = vmatpush1.msra.mxu0 0.0
        %969 = vmatprep.subr.mxu0 0.0
        %970 = vmatpush1.msra.mxu0 0.0
        %971 = vmatprep.subr.mxu0 0.0
        %972 = vmatpush1.msra.mxu0 0.0
        %973 = vmatprep.mubr.f32.mxu0 0.0
        %974 = vmatmul.mubr.f32.gmra.mrb[0].mxu0 %v907
        %v975 = vpop.f32.mrb[0].mxu0
        %v976 = vadd.f32 0.0, %v975
        %v977 = vpop.f32.mrb[0].mxu0
        %978 = vdwg.mxu0
        %v979 = vrcp.pop %v901
        %v980 = vmul.f32 %v976, %v979
        %981 = vrot.lane.b32.xlu0 %v489, 112
        %v982 = vpop.permute.xlu0 %981
        %983 = vrot.lane.b32.xlu0 %v570, 112
        %v984 = vpop.permute.xlu0 %983
        %v985 = vsel %vm654, %v982, 0
        %v987 = vsel %vm654, %v984, 0
        %989 = vmatprep.subr.mxu0 0.0
        %990 = vmatpush1.xpose.msra.mxu0 %v987
        %991 = vmatprep.subr.mxu0 0.0
        %992 = vmatpush1.xpose.msra.mxu0 0.0
        %993 = vmatprep.subr.mxu0 0.0
        %994 = vmatpush1.xpose.msra.mxu0 0.0
        %995 = vmatprep.subr.mxu0 0.0
        %996 = vmatpush1.xpose.msra.mxu0 0.0
        %997 = vmatprep.subr.mxu0 0.0
        %998 = vmatpush1.xpose.msra.mxu0 0.0
        %999 = vmatprep.subr.mxu0 0.0
        %1000 = vmatpush1.xpose.msra.mxu0 0.0
        %1001 = vmatprep.subr.mxu0 0.0
        %1002 = vmatpush1.xpose.msra.mxu0 0.0
        %1003 = vmatprep.subr.mxu0 0.0
        %1004 = vmatpush1.xpose.msra.mxu0 0.0
        %1005 = vmatprep.subr.mxu0 0.0
        %1006 = vmatpush1.xpose.msra.mxu0 0.0
        %1007 = vmatprep.subr.mxu0 0.0
        %1008 = vmatpush1.xpose.msra.mxu0 0.0
        %1009 = vmatprep.subr.mxu0 0.0
        %1010 = vmatpush1.xpose.msra.mxu0 0.0
        %1011 = vmatprep.subr.mxu0 0.0
        %1012 = vmatpush1.xpose.msra.mxu0 0.0
        %1013 = vmatprep.subr.mxu0 0.0
        %1014 = vmatpush1.xpose.msra.mxu0 0.0
        %1015 = vmatprep.subr.mxu0 0.0
        %1016 = vmatpush1.xpose.msra.mxu0 0.0
        %1017 = vmatprep.subr.mxu0 0.0
        %1018 = vmatpush1.xpose.msra.mxu0 0.0
        %1019 = vmatprep.subr.mxu0 0.0
        %1020 = vmatpush1.xpose.msra.mxu0 0.0
        %1021 = vmatprep.subr.mxu0 0.0
        %1022 = vmatpush1.xpose.msra.mxu0 0.0
        %1023 = vmatprep.subr.mxu0 0.0
        %1024 = vmatpush1.xpose.msra.mxu0 0.0
        %1025 = vmatprep.subr.mxu0 0.0
        %1026 = vmatpush1.xpose.msra.mxu0 0.0
        %1027 = vmatprep.subr.mxu0 0.0
        %1028 = vmatpush1.xpose.msra.mxu0 0.0
        %1029 = vmatprep.subr.mxu0 0.0
        %1030 = vmatpush1.xpose.msra.mxu0 0.0
        %1031 = vmatprep.subr.mxu0 0.0
        %1032 = vmatpush1.xpose.msra.mxu0 0.0
        %1033 = vmatprep.subr.mxu0 0.0
        %1034 = vmatpush1.xpose.msra.mxu0 0.0
        %1035 = vmatprep.subr.mxu0 0.0
        %1036 = vmatpush1.xpose.msra.mxu0 0.0
        %1037 = vmatprep.subr.mxu0 0.0
        %1038 = vmatpush1.xpose.msra.mxu0 0.0
        %1039 = vmatprep.subr.mxu0 0.0
        %1040 = vmatpush1.xpose.msra.mxu0 0.0
        %1041 = vmatprep.subr.mxu0 0.0
        %1042 = vmatpush1.xpose.msra.mxu0 0.0
        %1043 = vmatprep.subr.mxu0 0.0
        %1044 = vmatpush1.xpose.msra.mxu0 0.0
        %1045 = vmatprep.subr.mxu0 0.0
        %1046 = vmatpush1.xpose.msra.mxu0 0.0
        %1047 = vmatprep.subr.mxu0 0.0
        %1048 = vmatpush1.xpose.msra.mxu0 0.0
        %1049 = vmatprep.subr.mxu0 0.0
        %1050 = vmatpush1.xpose.msra.mxu0 0.0
        %1051 = vmatprep.subr.mxu0 0.0
        %1052 = vmatpush1.xpose.msra.mxu0 0.0
        %1053 = vmatprep.mubr.f32.mxu0 0.0
        %1054 = vmatmul.mubr.f32.gmra.mrb[0].mxu0 %v985
        %v1055 = vpop.f32.mrb[0].mxu0
        %v1056 = vadd.f32 0.0, %v1055
        %v1057 = vpop.f32.mrb[0].mxu0
        %1058 = vdwg.mxu0
        %v1059 = vsel %vm654, %v1056, -inf
        %1060 = vmax.xlane.f32.xlu0 %v1059
        %v1061 = vpop.xlane.xlu0 %1060
        %v1062 = vsub.f32 %v1056, %v1061
        %v1063 = vmul.f32 %v1062, 1.442695
        %v1064 = vpow.pop %v1063
        %v1065 = vsel %vm654, %v1064, 0.0
        %1066 = vadd.xlane.f32.xlu0 %v1065
        %v1067 = vpop.xlane.xlu0 %1066
        %1068 = vrot.lane.b32.xlu0 %v651, 112
        %v1069 = vpop.permute.xlu0 %1068
        %v1072 = vsel %vm654, %v1064, 0
        %1074 = vmatprep.subr.mxu0 0.0
        %1075 = vmatpush1.msra.mxu0 %v1069
        %1076 = vmatprep.subr.mxu0 0.0
        %1077 = vmatpush1.msra.mxu0 0.0
        %1078 = vmatprep.subr.mxu0 0.0
        %1079 = vmatpush1.msra.mxu0 0.0
        %1080 = vmatprep.subr.mxu0 0.0
        %1081 = vmatpush1.msra.mxu0 0.0
        %1082 = vmatprep.subr.mxu0 0.0
        %1083 = vmatpush1.msra.mxu0 0.0
        %1084 = vmatprep.subr.mxu0 0.0
        %1085 = vmatpush1.msra.mxu0 0.0
        %1086 = vmatprep.subr.mxu0 0.0
        %1087 = vmatpush1.msra.mxu0 0.0
        %1088 = vmatprep.subr.mxu0 0.0
        %1089 = vmatpush1.msra.mxu0 0.0
        %1090 = vmatprep.subr.mxu0 0.0
        %1091 = vmatpush1.msra.mxu0 0.0
        %1092 = vmatprep.subr.mxu0 0.0
        %1093 = vmatpush1.msra.mxu0 0.0
        %1094 = vmatprep.subr.mxu0 0.0
        %1095 = vmatpush1.msra.mxu0 0.0
        %1096 = vmatprep.subr.mxu0 0.0
        %1097 = vmatpush1.msra.mxu0 0.0
        %1098 = vmatprep.subr.mxu0 0.0
        %1099 = vmatpush1.msra.mxu0 0.0
        %1100 = vmatprep.subr.mxu0 0.0
        %1101 = vmatpush1.msra.mxu0 0.0
        %1102 = vmatprep.subr.mxu0 0.0
        %1103 = vmatpush1.msra.mxu0 0.0
        %1104 = vmatprep.subr.mxu0 0.0
        %1105 = vmatpush1.msra.mxu0 0.0
        %1106 = vmatprep.subr.mxu0 0.0
        %1107 = vmatpush1.msra.mxu0 0.0
        %1108 = vmatprep.subr.mxu0 0.0
        %1109 = vmatpush1.msra.mxu0 0.0
        %1110 = vmatprep.subr.mxu0 0.0
        %1111 = vmatpush1.msra.mxu0 0.0
        %1112 = vmatprep.subr.mxu0 0.0
        %1113 = vmatpush1.msra.mxu0 0.0
        %1114 = vmatprep.subr.mxu0 0.0
        %1115 = vmatpush1.msra.mxu0 0.0
        %1116 = vmatprep.subr.mxu0 0.0
        %1117 = vmatpush1.msra.mxu0 0.0
        %1118 = vmatprep.subr.mxu0 0.0
        %1119 = vmatpush1.msra.mxu0 0.0
        %1120 = vmatprep.subr.mxu0 0.0
        %1121 = vmatpush1.msra.mxu0 0.0
        %1122 = vmatprep.subr.mxu0 0.0
        %1123 = vmatpush1.msra.mxu0 0.0
        %1124 = vmatprep.subr.mxu0 0.0
        %1125 = vmatpush1.msra.mxu0 0.0
        %1126 = vmatprep.subr.mxu0 0.0
        %1127 = vmatpush1.msra.mxu0 0.0
        %1128 = vmatprep.subr.mxu0 0.0
        %1129 = vmatpush1.msra.mxu0 0.0
        %1130 = vmatprep.subr.mxu0 0.0
        %1131 = vmatpush1.msra.mxu0 0.0
        %1132 = vmatprep.subr.mxu0 0.0
        %1133 = vmatpush1.msra.mxu0 0.0
        %1134 = vmatprep.subr.mxu0 0.0
        %1135 = vmatpush1.msra.mxu0 0.0
        %1136 = vmatprep.subr.mxu0 0.0
        %1137 = vmatpush1.msra.mxu0 0.0
        %1138 = vmatprep.mubr.f32.mxu0 0.0
        %1139 = vmatmul.mubr.f32.gmra.mrb[0].mxu0 %v1072
        %v1140 = vpop.f32.mrb[0].mxu0
        %v1141 = vadd.f32 0.0, %v1140
        %v1142 = vpop.f32.mrb[0].mxu0
        %1143 = vdwg.mxu0
        %v1144 = vrcp.pop %v1067
        %v1145 = vmul.f32 %v1141, %v1144
        %1146 = vrot.lane.b32.xlu0 %v489, 104
        %v1147 = vpop.permute.xlu0 %1146
        %1148 = vrot.lane.b32.xlu0 %v570, 104
        %v1149 = vpop.permute.xlu0 %1148
        %v1150 = vsel %vm654, %v1147, 0
        %v1152 = vsel %vm654, %v1149, 0
        %1154 = vmatprep.subr.mxu0 0.0
        %1155 = vmatpush1.xpose.msra.mxu0 %v1152
        %1156 = vmatprep.subr.mxu0 0.0
        %1157 = vmatpush1.xpose.msra.mxu0 0.0
        %1158 = vmatprep.subr.mxu0 0.0
        %1159 = vmatpush1.xpose.msra.mxu0 0.0
        %1160 = vmatprep.subr.mxu0 0.0
        %1161 = vmatpush1.xpose.msra.mxu0 0.0
        %1162 = vmatprep.subr.mxu0 0.0
        %1163 = vmatpush1.xpose.msra.mxu0 0.0
        %1164 = vmatprep.subr.mxu0 0.0
        %1165 = vmatpush1.xpose.msra.mxu0 0.0
        %1166 = vmatprep.subr.mxu0 0.0
        %1167 = vmatpush1.xpose.msra.mxu0 0.0
        %1168 = vmatprep.subr.mxu0 0.0
        %1169 = vmatpush1.xpose.msra.mxu0 0.0
        %1170 = vmatprep.subr.mxu0 0.0
        %1171 = vmatpush1.xpose.msra.mxu0 0.0
        %1172 = vmatprep.subr.mxu0 0.0
        %1173 = vmatpush1.xpose.msra.mxu0 0.0
        %1174 = vmatprep.subr.mxu0 0.0
        %1175 = vmatpush1.xpose.msra.mxu0 0.0
        %1176 = vmatprep.subr.mxu0 0.0
        %1177 = vmatpush1.xpose.msra.mxu0 0.0
        %1178 = vmatprep.subr.mxu0 0.0
        %1179 = vmatpush1.xpose.msra.mxu0 0.0
        %1180 = vmatprep.subr.mxu0 0.0
        %1181 = vmatpush1.xpose.msra.mxu0 0.0
        %1182 = vmatprep.subr.mxu0 0.0
        %1183 = vmatpush1.xpose.msra.mxu0 0.0
        %1184 = vmatprep.subr.mxu0 0.0
        %1185 = vmatpush1.xpose.msra.mxu0 0.0
        %1186 = vmatprep.subr.mxu0 0.0
        %1187 = vmatpush1.xpose.msra.mxu0 0.0
        %1188 = vmatprep.subr.mxu0 0.0
        %1189 = vmatpush1.xpose.msra.mxu0 0.0
        %1190 = vmatprep.subr.mxu0 0.0
        %1191 = vmatpush1.xpose.msra.mxu0 0.0
        %1192 = vmatprep.subr.mxu0 0.0
        %1193 = vmatpush1.xpose.msra.mxu0 0.0
        %1194 = vmatprep.subr.mxu0 0.0
        %1195 = vmatpush1.xpose.msra.mxu0 0.0
        %1196 = vmatprep.subr.mxu0 0.0
        %1197 = vmatpush1.xpose.msra.mxu0 0.0
        %1198 = vmatprep.subr.mxu0 0.0
        %1199 = vmatpush1.xpose.msra.mxu0 0.0
        %1200 = vmatprep.subr.mxu0 0.0
        %1201 = vmatpush1.xpose.msra.mxu0 0.0
        %1202 = vmatprep.subr.mxu0 0.0
        %1203 = vmatpush1.xpose.msra.mxu0 0.0
        %1204 = vmatprep.subr.mxu0 0.0
        %1205 = vmatpush1.xpose.msra.mxu0 0.0
        %1206 = vmatprep.subr.mxu0 0.0
        %1207 = vmatpush1.xpose.msra.mxu0 0.0
        %1208 = vmatprep.subr.mxu0 0.0
        %1209 = vmatpush1.xpose.msra.mxu0 0.0
        %1210 = vmatprep.subr.mxu0 0.0
        %1211 = vmatpush1.xpose.msra.mxu0 0.0
        %1212 = vmatprep.subr.mxu0 0.0
        %1213 = vmatpush1.xpose.msra.mxu0 0.0
        %1214 = vmatprep.subr.mxu0 0.0
        %1215 = vmatpush1.xpose.msra.mxu0 0.0
        %1216 = vmatprep.subr.mxu0 0.0
        %1217 = vmatpush1.xpose.msra.mxu0 0.0
        %1218 = vmatprep.mubr.f32.mxu0 0.0
        %1219 = vmatmul.mubr.f32.gmra.mrb[0].mxu0 %v1150
        %v1220 = vpop.f32.mrb[0].mxu0
        %v1221 = vadd.f32 0.0, %v1220
        %v1222 = vpop.f32.mrb[0].mxu0
        %1223 = vdwg.mxu0
        %v1224 = vsel %vm654, %v1221, -inf
        %1225 = vmax.xlane.f32.xlu0 %v1224
        %v1226 = vpop.xlane.xlu0 %1225
        %v1227 = vsub.f32 %v1221, %v1226
        %v1228 = vmul.f32 %v1227, 1.442695
        %v1229 = vpow.pop %v1228
        %v1230 = vsel %vm654, %v1229, 0.0
        %1231 = vadd.xlane.f32.xlu0 %v1230
        %v1232 = vpop.xlane.xlu0 %1231
        %1233 = vrot.lane.b32.xlu0 %v651, 104
        %v1234 = vpop.permute.xlu0 %1233
        %v1237 = vsel %vm654, %v1229, 0
        %1239 = vmatprep.subr.mxu0 0.0
        %1240 = vmatpush1.msra.mxu0 %v1234
        %1241 = vmatprep.subr.mxu0 0.0
        %1242 = vmatpush1.msra.mxu0 0.0
        %1243 = vmatprep.subr.mxu0 0.0
        %1244 = vmatpush1.msra.mxu0 0.0
        %1245 = vmatprep.subr.mxu0 0.0
        %1246 = vmatpush1.msra.mxu0 0.0
        %1247 = vmatprep.subr.mxu0 0.0
        %1248 = vmatpush1.msra.mxu0 0.0
        %1249 = vmatprep.subr.mxu0 0.0
        %1250 = vmatpush1.msra.mxu0 0.0
        %1251 = vmatprep.subr.mxu0 0.0
        %1252 = vmatpush1.msra.mxu0 0.0
        %1253 = vmatprep.subr.mxu0 0.0
        %1254 = vmatpush1.msra.mxu0 0.0
        %1255 = vmatprep.subr.mxu0 0.0
        %1256 = vmatpush1.msra.mxu0 0.0
        %1257 = vmatprep.subr.mxu0 0.0
        %1258 = vmatpush1.msra.mxu0 0.0
        %1259 = vmatprep.subr.mxu0 0.0
        %1260 = vmatpush1.msra.mxu0 0.0
        %1261 = vmatprep.subr.mxu0 0.0
        %1262 = vmatpush1.msra.mxu0 0.0
        %1263 = vmatprep.subr.mxu0 0.0
        %1264 = vmatpush1.msra.mxu0 0.0
        %1265 = vmatprep.subr.mxu0 0.0
        %1266 = vmatpush1.msra.mxu0 0.0
        %1267 = vmatprep.subr.mxu0 0.0
        %1268 = vmatpush1.msra.mxu0 0.0
        %1269 = vmatprep.subr.mxu0 0.0
        %1270 = vmatpush1.msra.mxu0 0.0
        %1271 = vmatprep.subr.mxu0 0.0
        %1272 = vmatpush1.msra.mxu0 0.0
        %1273 = vmatprep.subr.mxu0 0.0
        %1274 = vmatpush1.msra.mxu0 0.0
        %1275 = vmatprep.subr.mxu0 0.0
        %1276 = vmatpush1.msra.mxu0 0.0
        %1277 = vmatprep.subr.mxu0 0.0
        %1278 = vmatpush1.msra.mxu0 0.0
        %1279 = vmatprep.subr.mxu0 0.0
        %1280 = vmatpush1.msra.mxu0 0.0
        %1281 = vmatprep.subr.mxu0 0.0
        %1282 = vmatpush1.msra.mxu0 0.0
        %1283 = vmatprep.subr.mxu0 0.0
        %1284 = vmatpush1.msra.mxu0 0.0
        %1285 = vmatprep.subr.mxu0 0.0
        %1286 = vmatpush1.msra.mxu0 0.0
        %1287 = vmatprep.subr.mxu0 0.0
        %1288 = vmatpush1.msra.mxu0 0.0
        %1289 = vmatprep.subr.mxu0 0.0
        %1290 = vmatpush1.msra.mxu0 0.0
        %1291 = vmatprep.subr.mxu0 0.0
        %1292 = vmatpush1.msra.mxu0 0.0
        %1293 = vmatprep.subr.mxu0 0.0
        %1294 = vmatpush1.msra.mxu0 0.0
        %1295 = vmatprep.subr.mxu0 0.0
        %1296 = vmatpush1.msra.mxu0 0.0
        %1297 = vmatprep.subr.mxu0 0.0
        %1298 = vmatpush1.msra.mxu0 0.0
        %1299 = vmatprep.subr.mxu0 0.0
        %1300 = vmatpush1.msra.mxu0 0.0
        %1301 = vmatprep.subr.mxu0 0.0
        %1302 = vmatpush1.msra.mxu0 0.0
        %1303 = vmatprep.mubr.f32.mxu0 0.0
        %1304 = vmatmul.mubr.f32.gmra.mrb[0].mxu0 %v1237
        %v1305 = vpop.f32.mrb[0].mxu0
        %v1306 = vadd.f32 0.0, %v1305
        %v1307 = vpop.f32.mrb[0].mxu0
        %1308 = vdwg.mxu0
        %v1309 = vrcp.pop %v1232
        %v1310 = vmul.f32 %v1306, %v1309
        %1312 = vrot.lane.b32.xlu0 %v980, 8
        %v1313 = vpop.permute.xlu0 %1312
        %1316 = vrot.lane.b32.xlu0 %v1145, 16
        %v1317 = vpop.permute.xlu0 %1316
        %1320 = vrot.lane.b32.xlu0 %v1310, 24
        %v1321 = vpop.permute.xlu0 %1320
        %v1323 = vsel %vm654, %v814, %v1313
        %vm1324 = vcmask 130048
        %v1325 = vsel %vm1324, %v1323, %v1317
        %vm1326 = vcmask 195584
        %v1327 = vsel %vm1326, %v1325, %v1321
        %v1328 = vld [vmem:[#allocation10] sm:$0xff]
        %v1329 = vld [vmem:[#allocation10 + $0x8] sm:$0xff]
        %v1330 = vld [vmem:[#allocation10 + $0x10] sm:$0xff]
        %v1331 = vld [vmem:[#allocation10 + $0x18] sm:$0xff]
        %v1332 = vld [vmem:[%s8] sm:$0x1]
        %v1334 = vlaneseq
        %v1335 = vshrl.u32 %v1334, 7
        %v1336 = vsub.s32 0, %v1335
        %v1337 = vrot.slane %v1332, %v1336
        %v1340 = vsel %vm418, %v1327, 0
        %1342 = vmatprep.subr.mxu0 0.0
        %1343 = vmatpush1.msra.mxu0 %v1328
        %1344 = vmatprep.subr.mxu0 0.0
        %1345 = vmatpush1.msra.mxu0 %v1329
        %1346 = vmatprep.subr.mxu0 0.0
        %1347 = vmatpush1.msra.mxu0 %v1330
        %1348 = vmatprep.subr.mxu0 0.0
        %1349 = vmatpush1.msra.mxu0 %v1331
        %1350 = vmatprep.subr.mxu0 0.0
        %1351 = vmatpush1.msra.mxu0 0.0
        %1352 = vmatprep.subr.mxu0 0.0
        %1353 = vmatpush1.msra.mxu0 0.0
        %1354 = vmatprep.subr.mxu0 0.0
        %1355 = vmatpush1.msra.mxu0 0.0
        %1356 = vmatprep.subr.mxu0 0.0
        %1357 = vmatpush1.msra.mxu0 0.0
        %1358 = vmatprep.subr.mxu0 0.0
        %1359 = vmatpush1.msra.mxu0 0.0
        %1360 = vmatprep.subr.mxu0 0.0
        %1361 = vmatpush1.msra.mxu0 0.0
        %1362 = vmatprep.subr.mxu0 0.0
        %1363 = vmatpush1.msra.mxu0 0.0
        %1364 = vmatprep.subr.mxu0 0.0
        %1365 = vmatpush1.msra.mxu0 0.0
        %1366 = vmatprep.subr.mxu0 0.0
        %1367 = vmatpush1.msra.mxu0 0.0
        %1368 = vmatprep.subr.mxu0 0.0
        %1369 = vmatpush1.msra.mxu0 0.0
        %1370 = vmatprep.subr.mxu0 0.0
        %1371 = vmatpush1.msra.mxu0 0.0
        %1372 = vmatprep.subr.mxu0 0.0
        %1373 = vmatpush1.msra.mxu0 0.0
        %1374 = vmatprep.subr.mxu0 0.0
        %1375 = vmatpush1.msra.mxu0 0.0
        %1376 = vmatprep.subr.mxu0 0.0
        %1377 = vmatpush1.msra.mxu0 0.0
        %1378 = vmatprep.subr.mxu0 0.0
        %1379 = vmatpush1.msra.mxu0 0.0
        %1380 = vmatprep.subr.mxu0 0.0
        %1381 = vmatpush1.msra.mxu0 0.0
        %1382 = vmatprep.subr.mxu0 0.0
        %1383 = vmatpush1.msra.mxu0 0.0
        %1384 = vmatprep.subr.mxu0 0.0
        %1385 = vmatpush1.msra.mxu0 0.0
        %1386 = vmatprep.subr.mxu0 0.0
        %1387 = vmatpush1.msra.mxu0 0.0
        %1388 = vmatprep.subr.mxu0 0.0
        %1389 = vmatpush1.msra.mxu0 0.0
        %1390 = vmatprep.subr.mxu0 0.0
        %1391 = vmatpush1.msra.mxu0 0.0
        %1392 = vmatprep.subr.mxu0 0.0
        %1393 = vmatpush1.msra.mxu0 0.0
        %1394 = vmatprep.subr.mxu0 0.0
        %1395 = vmatpush1.msra.mxu0 0.0
        %1396 = vmatprep.subr.mxu0 0.0
        %1397 = vmatpush1.msra.mxu0 0.0
        %1398 = vmatprep.subr.mxu0 0.0
        %1399 = vmatpush1.msra.mxu0 0.0
        %1400 = vmatprep.subr.mxu0 0.0
        %1401 = vmatpush1.msra.mxu0 0.0
        %1402 = vmatprep.subr.mxu0 0.0
        %1403 = vmatpush1.msra.mxu0 0.0
        %1404 = vmatprep.subr.mxu0 0.0
        %1405 = vmatpush1.msra.mxu0 0.0
        %1406 = vmatprep.mubr.f32.mxu0 0.0
        %1407 = vmatmul.mubr.f32.gmra.mrb[0].mxu0 %v1340
        %v1408 = vpop.f32.mrb[0].mxu0
        %v1409 = vadd.f32 %v1337, %v1408
        %v1410 = vpop.f32.mrb[0].mxu0
        %1411 = vdwg.mxu0
        %1412 = vst.msk [vmem:[%s405] sm:$0xff] %vm418, %v1409
        %s1413 = sand.u32 %s230, 1
        %s1414 = scalar_lea.sflag [#allocation4], %s1413
        %s1415 = sand.u32 %s230, 1
        %s1416 = smul.addr %s1415, 8
        %s1417 = scalar_lea.vmem [#allocation11], %s1416
        // Predicated region
        $region77: #{tpu_custom_call.1} parent=55 // pred_check
          %p1418 = pneg %p240
        $region78: #{tpu_custom_call.1} parent=55 // pred_check_branch
          %1420 = sbr.rel (%p1418) target = $region80
        $region79: #{tpu_custom_call.1} parent=55 // pred_region
          %s1422 = ssub.s32 128, 128
          %1423 = vsyncadd %s1414, %s1422
          %s1424 = smul.addr %s28, 128
          %s1425 = scalar_lea.hbm %s9, %s1424
          %s1427 = sshll.u32 %s1417, 4
          %s1428 = int_to_ptr.vmem [resolvable:$true] %s1427
          %1430 = dma.vmem_to_hbm [thread:$0]  %s1428, 128, %s1425, %s1414
        $region80: #{tpu_custom_call.1} parent=55 // pred_fallthru
          _
      $region56: #{tpu_custom_call.1} parent=5 // pred_fallthru
        _
      %p1431 = scmp.le.s32.totalorder 2, %s23
      // Predicated region
      $region81: #{tpu_custom_call.1} parent=5 // pred_check
        %p1432 = pneg %p1431
      $region82: #{tpu_custom_call.1} parent=5 // pred_check_branch
        %1434 = sbr.rel (%p1432) target = $region84
      $region83: #{tpu_custom_call.1} parent=5 // pred_region
        %s1435 = ssub.s32 %s23, 2
        // Predicated region
        $region85: #{tpu_custom_call.1} parent=83 // pred_check
          %p1436 = pneg %p246
        $region86: #{tpu_custom_call.1} parent=83 // pred_check_branch
          %1438 = sbr.rel (%p1436) target = $region88
        $region87: #{tpu_custom_call.1} parent=83 // pred_region
          %s1439 = sand.u32 %s231, 1
          %s1440 = scalar_lea.sflag [#allocation4], %s1439
          %s1441 = sand.u32 %s231, 1
          %s1442 = smul.addr %s1441, 8
          %s1443 = scalar_lea.vmem [#allocation11], %s1442
          %1444 = dma.done %s1440, 128
        $region88: #{tpu_custom_call.1} parent=83 // pred_fallthru
          _
      $region84: #{tpu_custom_call.1} parent=5 // pred_fallthru
        _
    $region6: #{tpu_custom_call.1} parent=1 // loop_footer
      %s27 = sadd.s32 1, %s23
    $region7: #{tpu_custom_call.1} parent=1 // loop_footer_branch
      %22 = sbr.rel target = $region3
    $region8: #{tpu_custom_call.1} parent=1 // loop_exit
      _
    %1445 = vsyncpa [#allocation3], 1
    %s1446 = scalar_lea.sflag [#allocation3], 1
    %1447 = vsyncpa %s1446, 1
    %1448 = vsyncpa [#allocation6], 1
    %1449 = vsyncpa [#allocation9], 1
    %1450 = vsyncpa [#allocation4], 1
    %s1451 = scalar_lea.sflag [#allocation4], 1
    %1452 = vsyncpa %s1451, 1

</llo_original>
